<compile_context>
chip_gen: v5e
topology: v5e:2x2
jax: 0.10.0
libtpu: 0.0.40
codegen_flags: <defaults>
</compile_context>

<pallas_src>
import functools

import jax
import jax.numpy as jnp
from jax.experimental import pallas as pl
from jax.experimental.pallas import tpu as pltpu


def _round_up(x, m):
    return ((x + m - 1) // m) * m


def _pad_gate_cols(w, H, Hp):
    """[..., 4H] -> [..., 4Hp], keeping PyTorch gate blocks (i, f, g, o) separate so
    every gate ends up lane-aligned at column offset k*Hp."""
    if Hp == H:
        return w
    pad = [(0, 0)] * (w.ndim - 1) + [(0, Hp - H)]
    return jnp.concatenate(
        [jnp.pad(w[..., k * H:(k + 1) * H], pad) for k in range(4)], axis=-1)


def _sigmoid_via_tanh(x):
    # sigmoid(x) == 0.5 * (tanh(0.5 * x) + 1): one EUP transcendental instead of
    # exp + reciprocal; the extra mul/add land on idle VALU slots.
    return 0.5 * (jnp.tanh(0.5 * x) + 1.0)


# --------------------------------------------------------------------------
# Parallel projection kernels (input projection and vocab projection)
# --------------------------------------------------------------------------

def _proj_bias_kernel(x_ref, w_ref, b_ref, o_ref):
    w = w_ref[...]
    acc = jnp.dot(x_ref[...].astype(w.dtype), w,
                  preferred_element_type=jnp.float32)
    o_ref[...] = (acc + b_ref[...]).astype(o_ref.dtype)   # bias add stays f32


def _proj_kernel(x_ref, w_ref, o_ref):
    w = w_ref[...]
    o_ref[...] = jnp.dot(x_ref[...].astype(w.dtype), w,
                         preferred_element_type=jnp.float32).astype(o_ref.dtype)


def _pick_tm(M):
    # Largest M-tile that divides M exactly (callers pass M = T*Bp, a multiple of 8),
    # so no dead MXU flops / HBM writes from M padding.
    for tm in (512, 256, 128, 64, 32, 16, 8):
        if M % tm == 0:
            return tm
    return M


def _parallel_proj(x, w, bias=None, out_dtype=jnp.float32):
    """x:[M,K] @ w:[K,N] (+ bias:[1,N]).  N must be a multiple of 128 (callers pad).

    Grid order is chosen so the LARGER operand's tile stays VMEM-resident along the
    inner grid axis (e.g. the big W_fc is streamed from HBM exactly once).
    """
    M, K = x.shape
    N = w.shape[1]

    if N % 512 == 0:
        tn = 512
    elif N % 256 == 0:
        tn = 256
    else:
        tn = 128                               # N is padded to a multiple of 128

    Mp = _round_up(M, 8)
    if Mp != M:                                # safety only; callers give M % 8 == 0
        x = jnp.pad(x, ((0, Mp - M), (0, 0)))
    tm = _pick_tm(Mp)

    x_bytes = x.size * x.dtype.itemsize
    w_bytes = w.size * w.dtype.itemsize
    if w_bytes >= x_bytes:
        # Weight dominates HBM traffic: make M the inner (fastest) axis so the
        # (K, tn) weight tile is fetched once per j and reused across all M tiles.
        grid = (N // tn, Mp // tm)
        x_spec = pl.BlockSpec((tm, K), lambda j, i: (i, 0))
        w_spec = pl.BlockSpec((K, tn), lambda j, i: (0, j))
        b_spec = pl.BlockSpec((1, tn), lambda j, i: (0, j))
        o_spec = pl.BlockSpec((tm, tn), lambda j, i: (i, j))
    else:
        # x dominates: make N the inner axis so the (tm, K) x tile stays resident.
        grid = (Mp // tm, N // tn)
        x_spec = pl.BlockSpec((tm, K), lambda i, j: (i, 0))
        w_spec = pl.BlockSpec((K, tn), lambda i, j: (0, j))
        b_spec = pl.BlockSpec((1, tn), lambda i, j: (0, j))
        o_spec = pl.BlockSpec((tm, tn), lambda i, j: (i, j))

    if bias is not None:
        kernel = _proj_bias_kernel
        in_specs = [x_spec, w_spec, b_spec]
        args = (x, w, bias)
    else:
        kernel = _proj_kernel
        in_specs = [x_spec, w_spec]
        args = (x, w)

    out = pl.pallas_call(
        kernel,
        out_shape=jax.ShapeDtypeStruct((Mp, N), out_dtype),
        grid_spec=pltpu.PrefetchScalarGridSpec(
            num_scalar_prefetch=0,
            grid=grid,
            in_specs=in_specs,
            out_specs=o_spec,
        ),
        compiler_params=pltpu.CompilerParams(
            dimension_semantics=("parallel", "parallel"),
            vmem_limit_bytes=32 * 1024 * 1024),
    )(*args)
    return out[:M]


# --------------------------------------------------------------------------
# Sequential LSTM recurrence kernel (streamed over T chunks, batch-parallel)
# --------------------------------------------------------------------------

def _lstm_recurrence_kernel(gx_ref, whh_ref, h_out_ref, h_scr, c_scr):
    # gx_ref    : [tt, tb, 4*Hp]  chunk of precomputed x @ W_ih^T + bias
    # whh_ref   : [Hp, 4*Hp]      resident recurrent weight (index_map -> (0, 0))
    # h_out_ref : [tt, tb, Hp]    chunk of hidden states
    # h_scr/c_scr: [tb, Hp] f32 VMEM scratch carried across the T-chunk grid axis
    tt = gx_ref.shape[0]
    Hp = whh_ref.shape[0]

    @pl.when(pl.program_id(1) == 0)            # new batch tile -> reset LSTM state
    def _():
        h_scr[...] = jnp.zeros_like(h_scr)
        c_scr[...] = jnp.zeros_like(c_scr)

    whh = whh_ref[...]                         # loaded once (bf16 on the fast path)

    def step(t, _):
        h = h_scr[...]
        c = c_scr[...]
        gates = gx_ref[t].astype(jnp.float32) + jnp.dot(
            h.astype(whh.dtype), whh, preferred_element_type=jnp.float32)
        # PyTorch gate order: input, forget, cell(g), output (lane-aligned slices).
        i_g = _sigmoid_via_tanh(gates[:, 0 * Hp:1 * Hp])
        f_g = _sigmoid_via_tanh(gates[:, 1 * Hp:2 * Hp])
        g_g = jnp.tanh(gates[:, 2 * Hp:3 * Hp])
        o_g = _sigmoid_via_tanh(gates[:, 3 * Hp:4 * Hp])
        c_new = f_g * c + i_g * g_g
        h_new = o_g * jnp.tanh(c_new)
        h_scr[...] = h_new
        c_scr[...] = c_new
        h_out_ref[t] = h_new.astype(h_out_ref.dtype)
        return 0

    unroll = tt if tt <= 8 else 4              # keep LLO visibility into the loop body
    jax.lax.fori_loop(0, tt, step, 0, unroll=unroll)


def _pick_tb(Bp):
    if Bp <= 128:
        return Bp
    for tb in (128, 64, 32, 16, 8):
        if Bp % tb == 0:
            return tb
    return Bp


def _pick_tt(T, tb, Hp, gx_itemsize, out_itemsize, budget=4 * 1024 * 1024):
    per_step = tb * 4 * Hp * gx_itemsize + tb * Hp * out_itemsize
    tt = int(max(1, min(T, budget // max(per_step, 1))))
    while T % tt:
        tt -= 1
    return tt


def _run_recurrence(gates_x, w_hh_t_p, out_dtype):
    T, Bp, G = gates_x.shape
    Hp = G // 4
    tb = _pick_tb(Bp)
    tt = _pick_tt(T, tb, Hp, gates_x.dtype.itemsize, jnp.dtype(out_dtype).itemsize)

    return pl.pallas_call(
        _lstm_recurrence_kernel,
        out_shape=jax.ShapeDtypeStruct((T, Bp, Hp), out_dtype),
        grid_spec=pltpu.PrefetchScalarGridSpec(
            num_scalar_prefetch=0,
            grid=(Bp // tb, T // tt),          # (batch tiles "parallel", T chunks "arbitrary")
            in_specs=[
                pl.BlockSpec((tt, tb, G), lambda b, t: (t, b, 0)),
                pl.BlockSpec((Hp, G), lambda b, t: (0, 0)),   # W_hh stays resident
            ],
            out_specs=pl.BlockSpec((tt, tb, Hp), lambda b, t: (t, b, 0)),
            scratch_shapes=[pltpu.VMEM((tb, Hp), jnp.float32),   # h carry
                            pltpu.VMEM((tb, Hp), jnp.float32)],  # c carry
        ),
        compiler_params=pltpu.CompilerParams(
            dimension_semantics=("parallel", "arbitrary"),
            vmem_limit_bytes=32 * 1024 * 1024),
    )(gates_x, w_hh_t_p)


# --------------------------------------------------------------------------
# Forward pass
# --------------------------------------------------------------------------

def decoder_rnn_forward(features, captions, params, use_bf16=True):
    """Pallas implementation of DecoderRNN.forward."""
    embed_w = params["embed_w"]      # [V, E]
    w_ih_t = params["w_ih_t"]        # [E, 4H]
    w_hh_t = params["w_hh_t"]        # [H, 4H]
    bias = params["bias"]            # [1, 4H]   (b_ih + b_hh)
    w_fc_t = params["w_fc_t"]        # [H, V]

    B, E = features.shape
    H = w_hh_t.shape[0]
    V = w_fc_t.shape[1]

    Bp = _round_up(B, 8)             # sublane alignment
    Hp = _round_up(H, 128)           # lane alignment for gate slices
    Vp = _round_up(V, 128)           # lane-dense FC output

    wdt = jnp.bfloat16 if use_bf16 else jnp.float32   # matmul operand / weight dtype
    adt = jnp.bfloat16 if use_bf16 else jnp.float32   # big activation intermediates

    # ---- pad parameters (zero padding keeps the math exact) ---------------
    w_ih_t_p = _pad_gate_cols(w_ih_t, H, Hp).astype(wdt)                       # [E, 4Hp]
    bias_p = _pad_gate_cols(bias, H, Hp)                                       # [1, 4Hp] f32
    w_hh_t_p = jnp.pad(_pad_gate_cols(w_hh_t, H, Hp),
                       ((0, Hp - H), (0, 0))).astype(wdt)                      # [Hp, 4Hp]
    w_fc_t_p = jnp.pad(w_fc_t, ((0, Hp - H), (0, Vp - V))).astype(wdt)         # [Hp, Vp]

    # ---- glue: embedding lookup + concat, batch padded ---------------------
    cap = captions[:, :-1]                                    # [B, T-1]
    cap_emb = jnp.take(embed_w, cap, axis=0)                  # [B, T-1, E]
    inputs = jnp.concatenate([features[:, None, :], cap_emb], axis=1)  # [B, T, E]
    T = inputs.shape[1]
    inputs = jnp.pad(inputs, ((0, Bp - B), (0, 0), (0, 0)))   # [Bp, T, E]
    x_flat = jnp.transpose(inputs, (1, 0, 2)).reshape(T * Bp, E)   # time-major [T*Bp, E]

    # ---- 1) parallel input projection: gates_x = x @ W_ih^T + b ------------
    gates_x = _parallel_proj(x_flat, w_ih_t_p, bias_p, out_dtype=adt)   # [T*Bp, 4Hp]
    gates_x = gates_x.reshape(T, Bp, 4 * Hp)

    # ---- 2) streamed sequential recurrence (only h @ W_hh^T per step) ------
    h_all = _run_recurrence(gates_x, w_hh_t_p, out_dtype=adt)           # [T, Bp, Hp]

    # ---- 3) transpose the SMALL h_all to batch-major, then parallel FC -----
    h_bt = jnp.transpose(h_all, (1, 0, 2)).reshape(Bp * T, Hp)          # [Bp*T, Hp]
    logits = _parallel_proj(h_bt, w_fc_t_p, out_dtype=jnp.float32)      # [Bp*T, Vp]
    return logits.reshape(Bp, T, Vp)[:B, :, :V]                         # [B, T, V]


# --------------------------------------------------------------------------
# Pure-JAX reference (mirrors PyTorch semantics) + params
# --------------------------------------------------------------------------

def _reference_forward(features, captions, params):
    embed_w = params["embed_w"]
    w_ih_t = params["w_ih_t"]
    w_hh_t = params["w_hh_t"]
    bias = params["bias"][0]
    w_fc_t = params["w_fc_t"]
    H = w_hh_t.shape[0]

    cap = captions[:, :-1]
    cap_emb = jnp.take(embed_w, cap, axis=0)
    inputs = jnp.concatenate([features[:, None, :], cap_emb], axis=1)
    x_seq = jnp.transpose(inputs, (1, 0, 2))

    B = features.shape[0]
    h0 = jnp.zeros((B, H), jnp.float32)
    c0 = jnp.zeros((B, H), jnp.float32)

    def step(carry, x):
        h, c = carry
        gates = x @ w_ih_t + h @ w_hh_t + bias
        i = jax.nn.sigmoid(gates[:, 0 * H:1 * H])
        f = jax.nn.sigmoid(gates[:, 1 * H:2 * H])
        g = jnp.tanh(gates[:, 2 * H:3 * H])
        o = jax.nn.sigmoid(gates[:, 3 * H:4 * H])
        c = f * c + i * g
        h = o * jnp.tanh(c)
        return (h, c), h

    _, hs = jax.lax.scan(step, (h0, c0), x_seq)     # [T, B, H]
    return jnp.transpose(hs @ w_fc_t, (1, 0, 2))    # [B, T, V]


def init_params(key, embed_size, hidden_size, vocab_size):
    k = jax.random.split(key, 6)
    scale = 0.1
    w_ih = scale * jax.random.normal(k[0], (4 * hidden_size, embed_size), jnp.float32)
    w_hh = scale * jax.random.normal(k[1], (4 * hidden_size, hidden_size), jnp.float32)
    b_ih = scale * jax.random.normal(k[2], (4 * hidden_size,), jnp.float32)
    b_hh = scale * jax.random.normal(k[3], (4 * hidden_size,), jnp.float32)
    return {
        "embed_w": scale * jax.random.normal(k[4], (vocab_size, embed_size), jnp.float32),
        "w_ih_t": w_ih.T,                       # [E, 4H]
        "w_hh_t": w_hh.T,                       # [H, 4H]
        "bias": (b_ih + b_hh)[None, :],         # [1, 4H]
        "w_fc_t": (scale * jax.random.normal(k[5], (vocab_size, hidden_size),
                                             jnp.float32)).T,   # [H, V]
    }


if __name__ == "__main__":
    B, T_cap = 4, 8            # batch, caption length (seq len after drop+feature = 8)
    embed_size, hidden_size, vocab_size = 32, 32, 128

    key = jax.random.PRNGKey(0)
    kf, kc, kp = jax.random.split(key, 3)
    features = jax.random.normal(kf, (B, embed_size), jnp.float32)
    captions = jax.random.randint(kc, (B, T_cap), 0, vocab_size, jnp.int32)
    params = init_params(kp, embed_size, hidden_size, vocab_size)

    ref = jax.block_until_ready(_reference_forward(features, captions, params))

    # Strict f32 path (bit-accuracy check of the kernel structure).
    out_f32 = jax.block_until_ready(
        jax.jit(functools.partial(decoder_rnn_forward, params=params,
                                  use_bf16=False))(features, captions))
    assert out_f32.shape == (B, T_cap, vocab_size), out_f32.shape
    err_f32 = float(jnp.abs(out_f32 - ref).max())
    assert err_f32 < 1e-4, err_f32

    # bf16-MXU fast path (looser tolerance: bf16 operand rounding, f32 gate math).
    out_bf16 = jax.block_until_ready(
        jax.jit(functools.partial(decoder_rnn_forward, params=params,
                                  use_bf16=True))(features, captions))
    assert out_bf16.shape == (B, T_cap, vocab_size), out_bf16.shape
    err_bf16 = float(jnp.abs(out_bf16 - ref).max())
    assert err_bf16 < 3e-2, err_bf16

    print("KERNEL_OK")
</pallas_src>

<mosaic_0001>
module attributes {stable_mosaic.version = 11 : i64} {
  func.func @_proj_bias_kernel(%arg0: i32, %arg1: i32, %arg2: memref<64x32xf32, #tpu.memory_space<vmem>>, %arg3: memref<32x512xf32, #tpu.memory_space<vmem>>, %arg4: memref<1x512xf32, #tpu.memory_space<vmem>>, %arg5: memref<64x512xf32, #tpu.memory_space<vmem>>) attributes {dimension_semantics = [#tpu.dimension_semantics<parallel>, #tpu.dimension_semantics<parallel>], iteration_bounds = array<i64: 1, 1>, scalar_prefetch = 0 : i64, scratch_operands = 0 : i64, tpu.core_type = #tpu.core_type<tc>, window_params = [{transform_indices = @transform_0, window_bounds = array<i64: 64, 32>}, {transform_indices = @transform_1, window_bounds = array<i64: 32, 512>}, {transform_indices = @transform_2, window_bounds = array<i64: 1, 512>}, {transform_indices = @transform_3, window_bounds = array<i64: 64, 512>}]} {
    %c0 = arith.constant 0 : index
    %c0_0 = arith.constant 0 : index
    %0 = vector.load %arg3[%c0, %c0_0] : memref<32x512xf32, #tpu.memory_space<vmem>>, vector<32x512xf32>
    %c0_1 = arith.constant 0 : index
    %c0_2 = arith.constant 0 : index
    %1 = vector.load %arg2[%c0_1, %c0_2] : memref<64x32xf32, #tpu.memory_space<vmem>>, vector<64x32xf32>
    %cst = arith.constant dense<0.000000e+00> : vector<64x512xf32>
    %2 = tpu.matmul %1, %0, %cst {dimension_numbers = #tpu.dot_dimension_numbers<[1], [0], [0], [1], [0, 0, 1, 1], [], []>} : vector<64x32xf32>, vector<32x512xf32>, vector<64x512xf32> -> vector<64x512xf32>
    %c0_3 = arith.constant 0 : index
    %c0_4 = arith.constant 0 : index
    %3 = vector.load %arg4[%c0_3, %c0_4] : memref<1x512xf32, #tpu.memory_space<vmem>>, vector<1x512xf32>
    %4 = vector.broadcast %3 : vector<1x512xf32> to vector<64x512xf32>
    %5 = arith.addf %2, %4 : vector<64x512xf32>
    %c0_5 = arith.constant 0 : index
    %c0_6 = arith.constant 0 : index
    %6 = vector.load %arg5[%c0_5, %c0_6] : memref<64x512xf32, #tpu.memory_space<vmem>>, vector<64x512xf32>
    tpu.vector_store %arg5[%c0_5, %c0_6], %5 {strides = array<i32>} : memref<64x512xf32, #tpu.memory_space<vmem>>, vector<64x512xf32>,
    return
  }
  func.func @transform_0(%arg0: i32, %arg1: i32) -> (i32, i32) {
    %c0_i32 = arith.constant 0 : i32
    %c0_i32_0 = arith.constant 0 : i32
    return %arg1, %c0_i32 : i32, i32
  }
  func.func @transform_1(%arg0: i32, %arg1: i32) -> (i32, i32) {
    %c0_i32 = arith.constant 0 : i32
    %c0_i32_0 = arith.constant 0 : i32
    return %c0_i32, %arg0 : i32, i32
  }
  func.func @transform_2(%arg0: i32, %arg1: i32) -> (i32, i32) {
    %c0_i32 = arith.constant 0 : i32
    %c0_i32_0 = arith.constant 0 : i32
    return %c0_i32, %arg0 : i32, i32
  }
  func.func @transform_3(%arg0: i32, %arg1: i32) -> (i32, i32) {
    %c0_i32 = arith.constant 0 : i32
    return %arg1, %arg0 : i32, i32
  }
}

module attributes {stable_mosaic.version = 11 : i64} {
  func.func @_proj_kernel(%arg0: i32, %arg1: i32, %arg2: memref<64x128xf32, #tpu.memory_space<vmem>>, %arg3: memref<128x128xf32, #tpu.memory_space<vmem>>, %arg4: memref<64x128xf32, #tpu.memory_space<vmem>>) attributes {dimension_semantics = [#tpu.dimension_semantics<parallel>, #tpu.dimension_semantics<parallel>], iteration_bounds = array<i64: 1, 1>, scalar_prefetch = 0 : i64, scratch_operands = 0 : i64, tpu.core_type = #tpu.core_type<tc>, window_params = [{transform_indices = @transform_0, window_bounds = array<i64: 64, 128>}, {transform_indices = @transform_1, window_bounds = array<i64: 128, 128>}, {transform_indices = @transform_2, window_bounds = array<i64: 64, 128>}]} {
    %c0 = arith.constant 0 : index
    %c0_0 = arith.constant 0 : index
    %0 = vector.load %arg3[%c0, %c0_0] : memref<128x128xf32, #tpu.memory_space<vmem>>, vector<128x128xf32>
    %c0_1 = arith.constant 0 : index
    %c0_2 = arith.constant 0 : index
    %1 = vector.load %arg2[%c0_1, %c0_2] : memref<64x128xf32, #tpu.memory_space<vmem>>, vector<64x128xf32>
    %cst = arith.constant dense<0.000000e+00> : vector<64x128xf32>
    %2 = tpu.matmul %1, %0, %cst {dimension_numbers = #tpu.dot_dimension_numbers<[1], [0], [0], [1], [0, 0, 1, 1], [], []>} : vector<64x128xf32>, vector<128x128xf32>, vector<64x128xf32> -> vector<64x128xf32>
    %c0_3 = arith.constant 0 : index
    %c0_4 = arith.constant 0 : index
    %3 = vector.load %arg4[%c0_3, %c0_4] : memref<64x128xf32, #tpu.memory_space<vmem>>, vector<64x128xf32>
    tpu.vector_store %arg4[%c0_3, %c0_4], %2 {strides = array<i32>} : memref<64x128xf32, #tpu.memory_space<vmem>>, vector<64x128xf32>,
    return
  }
  func.func @transform_0(%arg0: i32, %arg1: i32) -> (i32, i32) {
    %c0_i32 = arith.constant 0 : i32
    %c0_i32_0 = arith.constant 0 : i32
    return %arg1, %c0_i32 : i32, i32
  }
  func.func @transform_1(%arg0: i32, %arg1: i32) -> (i32, i32) {
    %c0_i32 = arith.constant 0 : i32
    %c0_i32_0 = arith.constant 0 : i32
    return %c0_i32, %arg0 : i32, i32
  }
  func.func @transform_2(%arg0: i32, %arg1: i32) -> (i32, i32) {
    %c0_i32 = arith.constant 0 : i32
    return %arg1, %arg0 : i32, i32
  }
}

module attributes {stable_mosaic.version = 11 : i64} {
  func.func @_lstm_recurrence_kernel(%arg0: i32, %arg1: i32, %arg2: memref<8x8x512xf32, #tpu.memory_space<vmem>>, %arg3: memref<128x512xf32, #tpu.memory_space<vmem>>, %arg4: memref<8x8x128xf32, #tpu.memory_space<vmem>>, %arg5: memref<8x128xf32, #tpu.memory_space<vmem>>, %arg6: memref<8x128xf32, #tpu.memory_space<vmem>>) attributes {dimension_semantics = [#tpu.dimension_semantics<parallel>, #tpu.dimension_semantics<arbitrary>], iteration_bounds = array<i64: 1, 1>, scalar_prefetch = 0 : i64, scratch_operands = 2 : i64, tpu.core_type = #tpu.core_type<tc>, window_params = [{transform_indices = @transform_0, window_bounds = array<i64: 8, 8, 512>}, {pipeline_mode = #tpu.pipeline_mode<synchronous>, transform_indices = @transform_1, window_bounds = array<i64: 128, 512>}, {transform_indices = @transform_2, window_bounds = array<i64: 8, 8, 128>}]} {
    %c0_i32 = arith.constant 0 : i32
    %0 = arith.cmpi eq, %arg1, %c0_i32 : i32
    %1 = arith.extui %0 : i1 to i32
    %c0_i32_0 = arith.constant 0 : i32
    %2 = arith.cmpi ne, %1, %c0_i32_0 : i32
    scf.if %2 {
      %cst_178 = arith.constant 0.000000e+00 : f32
      %356 = vector.broadcast %cst_178 : f32 to vector<8x128xf32>
      %c0_179 = arith.constant 0 : index
      %c0_180 = arith.constant 0 : index
      %357 = vector.load %arg5[%c0_179, %c0_180] : memref<8x128xf32, #tpu.memory_space<vmem>>, vector<8x128xf32>
      tpu.vector_store %arg5[%c0_179, %c0_180], %356 {strides = array<i32>} : memref<8x128xf32, #tpu.memory_space<vmem>>, vector<8x128xf32>,
      %cst_181 = arith.constant 0.000000e+00 : f32
      %358 = vector.broadcast %cst_181 : f32 to vector<8x128xf32>
      %c0_182 = arith.constant 0 : index
      %c0_183 = arith.constant 0 : index
      %359 = vector.load %arg6[%c0_182, %c0_183] : memref<8x128xf32, #tpu.memory_space<vmem>>, vector<8x128xf32>
      tpu.vector_store %arg6[%c0_182, %c0_183], %358 {strides = array<i32>} : memref<8x128xf32, #tpu.memory_space<vmem>>, vector<8x128xf32>,
    } else {
    }
    %c0 = arith.constant 0 : index
    %c0_1 = arith.constant 0 : index
    %3 = vector.load %arg3[%c0, %c0_1] : memref<128x512xf32, #tpu.memory_space<vmem>>, vector<128x512xf32>
    %c0_i32_2 = arith.constant 0 : i32
    %c0_3 = arith.constant 0 : index
    %c0_4 = arith.constant 0 : index
    %4 = vector.load %arg5[%c0_3, %c0_4] : memref<8x128xf32, #tpu.memory_space<vmem>>, vector<8x128xf32>
    %c0_5 = arith.constant 0 : index
    %c0_6 = arith.constant 0 : index
    %5 = vector.load %arg6[%c0_5, %c0_6] : memref<8x128xf32, #tpu.memory_space<vmem>>, vector<8x128xf32>
    %6 = arith.index_cast %c0_i32_2 : i32 to index
    %c0_7 = arith.constant 0 : index
    %c0_8 = arith.constant 0 : index
    %7 = vector.load %arg2[%6, %c0_7, %c0_8] : memref<8x8x512xf32, #tpu.memory_space<vmem>>, vector<1x8x512xf32>
    %8 = vector.shape_cast %7 : vector<1x8x512xf32> to vector<8x512xf32>
    %cst = arith.constant dense<0.000000e+00> : vector<8x512xf32>
    %9 = tpu.matmul %4, %3, %cst {dimension_numbers = #tpu.dot_dimension_numbers<[1], [0], [0], [1], [0, 0, 1, 1], [], []>} : vector<8x128xf32>, vector<128x512xf32>, vector<8x512xf32> -> vector<8x512xf32>
    %10 = arith.addf %8, %9 : vector<8x512xf32>
    %11 = vector.extract_strided_slice %10 {offsets = [0, 0], sizes = [8, 128], strides = [1, 1]} : vector<8x512xf32> to vector<8x128xf32>
    %cst_9 = arith.constant 5.000000e-01 : f32
    %12 = vector.broadcast %cst_9 : f32 to vector<8x128xf32>
    %13 = arith.mulf %12, %11 : vector<8x128xf32>
    %14 = math.tanh %13 : vector<8x128xf32>
    %cst_10 = arith.constant 1.000000e+00 : f32
    %15 = vector.broadcast %cst_10 : f32 to vector<8x128xf32>
    %16 = arith.addf %14, %15 : vector<8x128xf32>
    %cst_11 = arith.constant 5.000000e-01 : f32
    %17 = vector.broadcast %cst_11 : f32 to vector<8x128xf32>
    %18 = arith.mulf %17, %16 : vector<8x128xf32>
    %19 = vector.extract_strided_slice %10 {offsets = [0, 128], sizes = [8, 128], strides = [1, 1]} : vector<8x512xf32> to vector<8x128xf32>
    %cst_12 = arith.constant 5.000000e-01 : f32
    %20 = vector.broadcast %cst_12 : f32 to vector<8x128xf32>
    %21 = arith.mulf %20, %19 : vector<8x128xf32>
    %22 = math.tanh %21 : vector<8x128xf32>
    %cst_13 = arith.constant 1.000000e+00 : f32
    %23 = vector.broadcast %cst_13 : f32 to vector<8x128xf32>
    %24 = arith.addf %22, %23 : vector<8x128xf32>
    %cst_14 = arith.constant 5.000000e-01 : f32
    %25 = vector.broadcast %cst_14 : f32 to vector<8x128xf32>
    %26 = arith.mulf %25, %24 : vector<8x128xf32>
    %27 = vector.extract_strided_slice %10 {offsets = [0, 256], sizes = [8, 128], strides = [1, 1]} : vector<8x512xf32> to vector<8x128xf32>
    %28 = math.tanh %27 : vector<8x128xf32>
    %29 = vector.extract_strided_slice %10 {offsets = [0, 384], sizes = [8, 128], strides = [1, 1]} : vector<8x512xf32> to vector<8x128xf32>
    %cst_15 = arith.constant 5.000000e-01 : f32
    %30 = vector.broadcast %cst_15 : f32 to vector<8x128xf32>
    %31 = arith.mulf %30, %29 : vector<8x128xf32>
    %32 = math.tanh %31 : vector<8x128xf32>
    %cst_16 = arith.constant 1.000000e+00 : f32
    %33 = vector.broadcast %cst_16 : f32 to vector<8x128xf32>
    %34 = arith.addf %32, %33 : vector<8x128xf32>
    %cst_17 = arith.constant 5.000000e-01 : f32
    %35 = vector.broadcast %cst_17 : f32 to vector<8x128xf32>
    %36 = arith.mulf %35, %34 : vector<8x128xf32>
    %37 = arith.mulf %26, %5 : vector<8x128xf32>
    %38 = arith.mulf %18, %28 : vector<8x128xf32>
    %39 = arith.addf %37, %38 : vector<8x128xf32>
    %40 = math.tanh %39 : vector<8x128xf32>
    %41 = arith.mulf %36, %40 : vector<8x128xf32>
    %c0_18 = arith.constant 0 : index
    %c0_19 = arith.constant 0 : index
    %42 = vector.load %arg5[%c0_18, %c0_19] : memref<8x128xf32, #tpu.memory_space<vmem>>, vector<8x128xf32>
    tpu.vector_store %arg5[%c0_18, %c0_19], %41 {strides = array<i32>} : memref<8x128xf32, #tpu.memory_space<vmem>>, vector<8x128xf32>,
    %c0_20 = arith.constant 0 : index
    %c0_21 = arith.constant 0 : index
    %43 = vector.load %arg6[%c0_20, %c0_21] : memref<8x128xf32, #tpu.memory_space<vmem>>, vector<8x128xf32>
    tpu.vector_store %arg6[%c0_20, %c0_21], %39 {strides = array<i32>} : memref<8x128xf32, #tpu.memory_space<vmem>>, vector<8x128xf32>,
    %44 = arith.index_cast %c0_i32_2 : i32 to index
    %c0_22 = arith.constant 0 : index
    %c0_23 = arith.constant 0 : index
    %45 = vector.load %arg4[%44, %c0_22, %c0_23] : memref<8x8x128xf32, #tpu.memory_space<vmem>>, vector<1x8x128xf32>
    %46 = vector.shape_cast %45 : vector<1x8x128xf32> to vector<8x128xf32>
    %47 = vector.shape_cast %41 : vector<8x128xf32> to vector<1x8x128xf32>
    tpu.vector_store %arg4[%44, %c0_22, %c0_23], %47 {strides = array<i32>} : memref<8x8x128xf32, #tpu.memory_space<vmem>>, vector<1x8x128xf32>,
    %c1_i32 = arith.constant 1 : i32
    %c0_24 = arith.constant 0 : index
    %c0_25 = arith.constant 0 : index
    %48 = vector.load %arg5[%c0_24, %c0_25] : memref<8x128xf32, #tpu.memory_space<vmem>>, vector<8x128xf32>
    %c0_26 = arith.constant 0 : index
    %c0_27 = arith.constant 0 : index
    %49 = vector.load %arg6[%c0_26, %c0_27] : memref<8x128xf32, #tpu.memory_space<vmem>>, vector<8x128xf32>
    %50 = arith.index_cast %c1_i32 : i32 to index
    %c0_28 = arith.constant 0 : index
    %c0_29 = arith.constant 0 : index
    %51 = vector.load %arg2[%50, %c0_28, %c0_29] : memref<8x8x512xf32, #tpu.memory_space<vmem>>, vector<1x8x512xf32>
    %52 = vector.shape_cast %51 : vector<1x8x512xf32> to vector<8x512xf32>
    %cst_30 = arith.constant dense<0.000000e+00> : vector<8x512xf32>
    %53 = tpu.matmul %48, %3, %cst_30 {dimension_numbers = #tpu.dot_dimension_numbers<[1], [0], [0], [1], [0, 0, 1, 1], [], []>} : vector<8x128xf32>, vector<128x512xf32>, vector<8x512xf32> -> vector<8x512xf32>
    %54 = arith.addf %52, %53 : vector<8x512xf32>
    %55 = vector.extract_strided_slice %54 {offsets = [0, 0], sizes = [8, 128], strides = [1, 1]} : vector<8x512xf32> to vector<8x128xf32>
    %cst_31 = arith.constant 5.000000e-01 : f32
    %56 = vector.broadcast %cst_31 : f32 to vector<8x128xf32>
    %57 = arith.mulf %56, %55 : vector<8x128xf32>
    %58 = math.tanh %57 : vector<8x128xf32>
    %cst_32 = arith.constant 1.000000e+00 : f32
    %59 = vector.broadcast %cst_32 : f32 to vector<8x128xf32>
    %60 = arith.addf %58, %59 : vector<8x128xf32>
    %cst_33 = arith.constant 5.000000e-01 : f32
    %61 = vector.broadcast %cst_33 : f32 to vector<8x128xf32>
    %62 = arith.mulf %61, %60 : vector<8x128xf32>
    %63 = vector.extract_strided_slice %54 {offsets = [0, 128], sizes = [8, 128], strides = [1, 1]} : vector<8x512xf32> to vector<8x128xf32>
    %cst_34 = arith.constant 5.000000e-01 : f32
    %64 = vector.broadcast %cst_34 : f32 to vector<8x128xf32>
    %65 = arith.mulf %64, %63 : vector<8x128xf32>
    %66 = math.tanh %65 : vector<8x128xf32>
    %cst_35 = arith.constant 1.000000e+00 : f32
    %67 = vector.broadcast %cst_35 : f32 to vector<8x128xf32>
    %68 = arith.addf %66, %67 : vector<8x128xf32>
    %cst_36 = arith.constant 5.000000e-01 : f32
    %69 = vector.broadcast %cst_36 : f32 to vector<8x128xf32>
    %70 = arith.mulf %69, %68 : vector<8x128xf32>
    %71 = vector.extract_strided_slice %54 {offsets = [0, 256], sizes = [8, 128], strides = [1, 1]} : vector<8x512xf32> to vector<8x128xf32>
    %72 = math.tanh %71 : vector<8x128xf32>
    %73 = vector.extract_strided_slice %54 {offsets = [0, 384], sizes = [8, 128], strides = [1, 1]} : vector<8x512xf32> to vector<8x128xf32>
    %cst_37 = arith.constant 5.000000e-01 : f32
    %74 = vector.broadcast %cst_37 : f32 to vector<8x128xf32>
    %75 = arith.mulf %74, %73 : vector<8x128xf32>
    %76 = math.tanh %75 : vector<8x128xf32>
    %cst_38 = arith.constant 1.000000e+00 : f32
    %77 = vector.broadcast %cst_38 : f32 to vector<8x128xf32>
    %78 = arith.addf %76, %77 : vector<8x128xf32>
    %cst_39 = arith.constant 5.000000e-01 : f32
    %79 = vector.broadcast %cst_39 : f32 to vector<8x128xf32>
    %80 = arith.mulf %79, %78 : vector<8x128xf32>
    %81 = arith.mulf %70, %49 : vector<8x128xf32>
    %82 = arith.mulf %62, %72 : vector<8x128xf32>
    %83 = arith.addf %81, %82 : vector<8x128xf32>
    %84 = math.tanh %83 : vector<8x128xf32>
    %85 = arith.mulf %80, %84 : vector<8x128xf32>
    %c0_40 = arith.constant 0 : index
    %c0_41 = arith.constant 0 : index
    %86 = vector.load %arg5[%c0_40, %c0_41] : memref<8x128xf32, #tpu.memory_space<vmem>>, vector<8x128xf32>
    tpu.vector_store %arg5[%c0_40, %c0_41], %85 {strides = array<i32>} : memref<8x128xf32, #tpu.memory_space<vmem>>, vector<8x128xf32>,
    %c0_42 = arith.constant 0 : index
    %c0_43 = arith.constant 0 : index
    %87 = vector.load %arg6[%c0_42, %c0_43] : memref<8x128xf32, #tpu.memory_space<vmem>>, vector<8x128xf32>
    tpu.vector_store %arg6[%c0_42, %c0_43], %83 {strides = array<i32>} : memref<8x128xf32, #tpu.memory_space<vmem>>, vector<8x128xf32>,
    %88 = arith.index_cast %c1_i32 : i32 to index
    %c0_44 = arith.constant 0 : index
    %c0_45 = arith.constant 0 : index
    %89 = vector.load %arg4[%88, %c0_44, %c0_45] : memref<8x8x128xf32, #tpu.memory_space<vmem>>, vector<1x8x128xf32>
    %90 = vector.shape_cast %89 : vector<1x8x128xf32> to vector<8x128xf32>
    %91 = vector.shape_cast %85 : vector<8x128xf32> to vector<1x8x128xf32>
    tpu.vector_store %arg4[%88, %c0_44, %c0_45], %91 {strides = array<i32>} : memref<8x8x128xf32, #tpu.memory_space<vmem>>, vector<1x8x128xf32>,
    %c2_i32 = arith.constant 2 : i32
    %c0_46 = arith.constant 0 : index
    %c0_47 = arith.constant 0 : index
    %92 = vector.load %arg5[%c0_46, %c0_47] : memref<8x128xf32, #tpu.memory_space<vmem>>, vector<8x128xf32>
    %c0_48 = arith.constant 0 : index
    %c0_49 = arith.constant 0 : index
    %93 = vector.load %arg6[%c0_48, %c0_49] : memref<8x128xf32, #tpu.memory_space<vmem>>, vector<8x128xf32>
    %94 = arith.index_cast %c2_i32 : i32 to index
    %c0_50 = arith.constant 0 : index
    %c0_51 = arith.constant 0 : index
    %95 = vector.load %arg2[%94, %c0_50, %c0_51] : memref<8x8x512xf32, #tpu.memory_space<vmem>>, vector<1x8x512xf32>
    %96 = vector.shape_cast %95 : vector<1x8x512xf32> to vector<8x512xf32>
    %cst_52 = arith.constant dense<0.000000e+00> : vector<8x512xf32>
    %97 = tpu.matmul %92, %3, %cst_52 {dimension_numbers = #tpu.dot_dimension_numbers<[1], [0], [0], [1], [0, 0, 1, 1], [], []>} : vector<8x128xf32>, vector<128x512xf32>, vector<8x512xf32> -> vector<8x512xf32>
    %98 = arith.addf %96, %97 : vector<8x512xf32>
    %99 = vector.extract_strided_slice %98 {offsets = [0, 0], sizes = [8, 128], strides = [1, 1]} : vector<8x512xf32> to vector<8x128xf32>
    %cst_53 = arith.constant 5.000000e-01 : f32
    %100 = vector.broadcast %cst_53 : f32 to vector<8x128xf32>
    %101 = arith.mulf %100, %99 : vector<8x128xf32>
    %102 = math.tanh %101 : vector<8x128xf32>
    %cst_54 = arith.constant 1.000000e+00 : f32
    %103 = vector.broadcast %cst_54 : f32 to vector<8x128xf32>
    %104 = arith.addf %102, %103 : vector<8x128xf32>
    %cst_55 = arith.constant 5.000000e-01 : f32
    %105 = vector.broadcast %cst_55 : f32 to vector<8x128xf32>
    %106 = arith.mulf %105, %104 : vector<8x128xf32>
    %107 = vector.extract_strided_slice %98 {offsets = [0, 128], sizes = [8, 128], strides = [1, 1]} : vector<8x512xf32> to vector<8x128xf32>
    %cst_56 = arith.constant 5.000000e-01 : f32
    %108 = vector.broadcast %cst_56 : f32 to vector<8x128xf32>
    %109 = arith.mulf %108, %107 : vector<8x128xf32>
    %110 = math.tanh %109 : vector<8x128xf32>
    %cst_57 = arith.constant 1.000000e+00 : f32
    %111 = vector.broadcast %cst_57 : f32 to vector<8x128xf32>
    %112 = arith.addf %110, %111 : vector<8x128xf32>
    %cst_58 = arith.constant 5.000000e-01 : f32
    %113 = vector.broadcast %cst_58 : f32 to vector<8x128xf32>
    %114 = arith.mulf %113, %112 : vector<8x128xf32>
    %115 = vector.extract_strided_slice %98 {offsets = [0, 256], sizes = [8, 128], strides = [1, 1]} : vector<8x512xf32> to vector<8x128xf32>
    %116 = math.tanh %115 : vector<8x128xf32>
    %117 = vector.extract_strided_slice %98 {offsets = [0, 384], sizes = [8, 128], strides = [1, 1]} : vector<8x512xf32> to vector<8x128xf32>
    %cst_59 = arith.constant 5.000000e-01 : f32
    %118 = vector.broadcast %cst_59 : f32 to vector<8x128xf32>
    %119 = arith.mulf %118, %117 : vector<8x128xf32>
    %120 = math.tanh %119 : vector<8x128xf32>
    %cst_60 = arith.constant 1.000000e+00 : f32
    %121 = vector.broadcast %cst_60 : f32 to vector<8x128xf32>
    %122 = arith.addf %120, %121 : vector<8x128xf32>
    %cst_61 = arith.constant 5.000000e-01 : f32
    %123 = vector.broadcast %cst_61 : f32 to vector<8x128xf32>
    %124 = arith.mulf %123, %122 : vector<8x128xf32>
    %125 = arith.mulf %114, %93 : vector<8x128xf32>
    %126 = arith.mulf %106, %116 : vector<8x128xf32>
    %127 = arith.addf %125, %126 : vector<8x128xf32>
    %128 = math.tanh %127 : vector<8x128xf32>
    %129 = arith.mulf %124, %128 : vector<8x128xf32>
    %c0_62 = arith.constant 0 : index
    %c0_63 = arith.constant 0 : index
    %130 = vector.load %arg5[%c0_62, %c0_63] : memref<8x128xf32, #tpu.memory_space<vmem>>, vector<8x128xf32>
    tpu.vector_store %arg5[%c0_62, %c0_63], %129 {strides = array<i32>} : memref<8x128xf32, #tpu.memory_space<vmem>>, vector<8x128xf32>,
    %c0_64 = arith.constant 0 : index
    %c0_65 = arith.constant 0 : index
    %131 = vector.load %arg6[%c0_64, %c0_65] : memref<8x128xf32, #tpu.memory_space<vmem>>, vector<8x128xf32>
    tpu.vector_store %arg6[%c0_64, %c0_65], %127 {strides = array<i32>} : memref<8x128xf32, #tpu.memory_space<vmem>>, vector<8x128xf32>,
    %132 = arith.index_cast %c2_i32 : i32 to index
    %c0_66 = arith.constant 0 : index
    %c0_67 = arith.constant 0 : index
    %133 = vector.load %arg4[%132, %c0_66, %c0_67] : memref<8x8x128xf32, #tpu.memory_space<vmem>>, vector<1x8x128xf32>
    %134 = vector.shape_cast %133 : vector<1x8x128xf32> to vector<8x128xf32>
    %135 = vector.shape_cast %129 : vector<8x128xf32> to vector<1x8x128xf32>
    tpu.vector_store %arg4[%132, %c0_66, %c0_67], %135 {strides = array<i32>} : memref<8x8x128xf32, #tpu.memory_space<vmem>>, vector<1x8x128xf32>,
    %c3_i32 = arith.constant 3 : i32
    %c0_68 = arith.constant 0 : index
    %c0_69 = arith.constant 0 : index
    %136 = vector.load %arg5[%c0_68, %c0_69] : memref<8x128xf32, #tpu.memory_space<vmem>>, vector<8x128xf32>
    %c0_70 = arith.constant 0 : index
    %c0_71 = arith.constant 0 : index
    %137 = vector.load %arg6[%c0_70, %c0_71] : memref<8x128xf32, #tpu.memory_space<vmem>>, vector<8x128xf32>
    %138 = arith.index_cast %c3_i32 : i32 to index
    %c0_72 = arith.constant 0 : index
    %c0_73 = arith.constant 0 : index
    %139 = vector.load %arg2[%138, %c0_72, %c0_73] : memref<8x8x512xf32, #tpu.memory_space<vmem>>, vector<1x8x512xf32>
    %140 = vector.shape_cast %139 : vector<1x8x512xf32> to vector<8x512xf32>
    %cst_74 = arith.constant dense<0.000000e+00> : vector<8x512xf32>
    %141 = tpu.matmul %136, %3, %cst_74 {dimension_numbers = #tpu.dot_dimension_numbers<[1], [0], [0], [1], [0, 0, 1, 1], [], []>} : vector<8x128xf32>, vector<128x512xf32>, vector<8x512xf32> -> vector<8x512xf32>
    %142 = arith.addf %140, %141 : vector<8x512xf32>
    %143 = vector.extract_strided_slice %142 {offsets = [0, 0], sizes = [8, 128], strides = [1, 1]} : vector<8x512xf32> to vector<8x128xf32>
    %cst_75 = arith.constant 5.000000e-01 : f32
    %144 = vector.broadcast %cst_75 : f32 to vector<8x128xf32>
    %145 = arith.mulf %144, %143 : vector<8x128xf32>
    %146 = math.tanh %145 : vector<8x128xf32>
    %cst_76 = arith.constant 1.000000e+00 : f32
    %147 = vector.broadcast %cst_76 : f32 to vector<8x128xf32>
    %148 = arith.addf %146, %147 : vector<8x128xf32>
    %cst_77 = arith.constant 5.000000e-01 : f32
    %149 = vector.broadcast %cst_77 : f32 to vector<8x128xf32>
    %150 = arith.mulf %149, %148 : vector<8x128xf32>
    %151 = vector.extract_strided_slice %142 {offsets = [0, 128], sizes = [8, 128], strides = [1, 1]} : vector<8x512xf32> to vector<8x128xf32>
    %cst_78 = arith.constant 5.000000e-01 : f32
    %152 = vector.broadcast %cst_78 : f32 to vector<8x128xf32>
    %153 = arith.mulf %152, %151 : vector<8x128xf32>
    %154 = math.tanh %153 : vector<8x128xf32>
    %cst_79 = arith.constant 1.000000e+00 : f32
    %155 = vector.broadcast %cst_79 : f32 to vector<8x128xf32>
    %156 = arith.addf %154, %155 : vector<8x128xf32>
    %cst_80 = arith.constant 5.000000e-01 : f32
    %157 = vector.broadcast %cst_80 : f32 to vector<8x128xf32>
    %158 = arith.mulf %157, %156 : vector<8x128xf32>
    %159 = vector.extract_strided_slice %142 {offsets = [0, 256], sizes = [8, 128], strides = [1, 1]} : vector<8x512xf32> to vector<8x128xf32>
    %160 = math.tanh %159 : vector<8x128xf32>
    %161 = vector.extract_strided_slice %142 {offsets = [0, 384], sizes = [8, 128], strides = [1, 1]} : vector<8x512xf32> to vector<8x128xf32>
    %cst_81 = arith.constant 5.000000e-01 : f32
    %162 = vector.broadcast %cst_81 : f32 to vector<8x128xf32>
    %163 = arith.mulf %162, %161 : vector<8x128xf32>
    %164 = math.tanh %163 : vector<8x128xf32>
    %cst_82 = arith.constant 1.000000e+00 : f32
    %165 = vector.broadcast %cst_82 : f32 to vector<8x128xf32>
    %166 = arith.addf %164, %165 : vector<8x128xf32>
    %cst_83 = arith.constant 5.000000e-01 : f32
    %167 = vector.broadcast %cst_83 : f32 to vector<8x128xf32>
    %168 = arith.mulf %167, %166 : vector<8x128xf32>
    %169 = arith.mulf %158, %137 : vector<8x128xf32>
    %170 = arith.mulf %150, %160 : vector<8x128xf32>
    %171 = arith.addf %169, %170 : vector<8x128xf32>
    %172 = math.tanh %171 : vector<8x128xf32>
    %173 = arith.mulf %168, %172 : vector<8x128xf32>
    %c0_84 = arith.constant 0 : index
    %c0_85 = arith.constant 0 : index
    %174 = vector.load %arg5[%c0_84, %c0_85] : memref<8x128xf32, #tpu.memory_space<vmem>>, vector<8x128xf32>
    tpu.vector_store %arg5[%c0_84, %c0_85], %173 {strides = array<i32>} : memref<8x128xf32, #tpu.memory_space<vmem>>, vector<8x128xf32>,
    %c0_86 = arith.constant 0 : index
    %c0_87 = arith.constant 0 : index
    %175 = vector.load %arg6[%c0_86, %c0_87] : memref<8x128xf32, #tpu.memory_space<vmem>>, vector<8x128xf32>
    tpu.vector_store %arg6[%c0_86, %c0_87], %171 {strides = array<i32>} : memref<8x128xf32, #tpu.memory_space<vmem>>, vector<8x128xf32>,
    %176 = arith.index_cast %c3_i32 : i32 to index
    %c0_88 = arith.constant 0 : index
    %c0_89 = arith.constant 0 : index
    %177 = vector.load %arg4[%176, %c0_88, %c0_89] : memref<8x8x128xf32, #tpu.memory_space<vmem>>, vector<1x8x128xf32>
    %178 = vector.shape_cast %177 : vector<1x8x128xf32> to vector<8x128xf32>
    %179 = vector.shape_cast %173 : vector<8x128xf32> to vector<1x8x128xf32>
    tpu.vector_store %arg4[%176, %c0_88, %c0_89], %179 {strides = array<i32>} : memref<8x8x128xf32, #tpu.memory_space<vmem>>, vector<1x8x128xf32>,
    %c4_i32 = arith.constant 4 : i32
    %c0_90 = arith.constant 0 : index
    %c0_91 = arith.constant 0 : index
    %180 = vector.load %arg5[%c0_90, %c0_91] : memref<8x128xf32, #tpu.memory_space<vmem>>, vector<8x128xf32>
    %c0_92 = arith.constant 0 : index
    %c0_93 = arith.constant 0 : index
    %181 = vector.load %arg6[%c0_92, %c0_93] : memref<8x128xf32, #tpu.memory_space<vmem>>, vector<8x128xf32>
    %182 = arith.index_cast %c4_i32 : i32 to index
    %c0_94 = arith.constant 0 : index
    %c0_95 = arith.constant 0 : index
    %183 = vector.load %arg2[%182, %c0_94, %c0_95] : memref<8x8x512xf32, #tpu.memory_space<vmem>>, vector<1x8x512xf32>
    %184 = vector.shape_cast %183 : vector<1x8x512xf32> to vector<8x512xf32>
    %cst_96 = arith.constant dense<0.000000e+00> : vector<8x512xf32>
    %185 = tpu.matmul %180, %3, %cst_96 {dimension_numbers = #tpu.dot_dimension_numbers<[1], [0], [0], [1], [0, 0, 1, 1], [], []>} : vector<8x128xf32>, vector<128x512xf32>, vector<8x512xf32> -> vector<8x512xf32>
    %186 = arith.addf %184, %185 : vector<8x512xf32>
    %187 = vector.extract_strided_slice %186 {offsets = [0, 0], sizes = [8, 128], strides = [1, 1]} : vector<8x512xf32> to vector<8x128xf32>
    %cst_97 = arith.constant 5.000000e-01 : f32
    %188 = vector.broadcast %cst_97 : f32 to vector<8x128xf32>
    %189 = arith.mulf %188, %187 : vector<8x128xf32>
    %190 = math.tanh %189 : vector<8x128xf32>
    %cst_98 = arith.constant 1.000000e+00 : f32
    %191 = vector.broadcast %cst_98 : f32 to vector<8x128xf32>
    %192 = arith.addf %190, %191 : vector<8x128xf32>
    %cst_99 = arith.constant 5.000000e-01 : f32
    %193 = vector.broadcast %cst_99 : f32 to vector<8x128xf32>
    %194 = arith.mulf %193, %192 : vector<8x128xf32>
    %195 = vector.extract_strided_slice %186 {offsets = [0, 128], sizes = [8, 128], strides = [1, 1]} : vector<8x512xf32> to vector<8x128xf32>
    %cst_100 = arith.constant 5.000000e-01 : f32
    %196 = vector.broadcast %cst_100 : f32 to vector<8x128xf32>
    %197 = arith.mulf %196, %195 : vector<8x128xf32>
    %198 = math.tanh %197 : vector<8x128xf32>
    %cst_101 = arith.constant 1.000000e+00 : f32
    %199 = vector.broadcast %cst_101 : f32 to vector<8x128xf32>
    %200 = arith.addf %198, %199 : vector<8x128xf32>
    %cst_102 = arith.constant 5.000000e-01 : f32
    %201 = vector.broadcast %cst_102 : f32 to vector<8x128xf32>
    %202 = arith.mulf %201, %200 : vector<8x128xf32>
    %203 = vector.extract_strided_slice %186 {offsets = [0, 256], sizes = [8, 128], strides = [1, 1]} : vector<8x512xf32> to vector<8x128xf32>
    %204 = math.tanh %203 : vector<8x128xf32>
    %205 = vector.extract_strided_slice %186 {offsets = [0, 384], sizes = [8, 128], strides = [1, 1]} : vector<8x512xf32> to vector<8x128xf32>
    %cst_103 = arith.constant 5.000000e-01 : f32
    %206 = vector.broadcast %cst_103 : f32 to vector<8x128xf32>
    %207 = arith.mulf %206, %205 : vector<8x128xf32>
    %208 = math.tanh %207 : vector<8x128xf32>
    %cst_104 = arith.constant 1.000000e+00 : f32
    %209 = vector.broadcast %cst_104 : f32 to vector<8x128xf32>
    %210 = arith.addf %208, %209 : vector<8x128xf32>
    %cst_105 = arith.constant 5.000000e-01 : f32
    %211 = vector.broadcast %cst_105 : f32 to vector<8x128xf32>
    %212 = arith.mulf %211, %210 : vector<8x128xf32>
    %213 = arith.mulf %202, %181 : vector<8x128xf32>
    %214 = arith.mulf %194, %204 : vector<8x128xf32>
    %215 = arith.addf %213, %214 : vector<8x128xf32>
    %216 = math.tanh %215 : vector<8x128xf32>
    %217 = arith.mulf %212, %216 : vector<8x128xf32>
    %c0_106 = arith.constant 0 : index
    %c0_107 = arith.constant 0 : index
    %218 = vector.load %arg5[%c0_106, %c0_107] : memref<8x128xf32, #tpu.memory_space<vmem>>, vector<8x128xf32>
    tpu.vector_store %arg5[%c0_106, %c0_107], %217 {strides = array<i32>} : memref<8x128xf32, #tpu.memory_space<vmem>>, vector<8x128xf32>,
    %c0_108 = arith.constant 0 : index
    %c0_109 = arith.constant 0 : index
    %219 = vector.load %arg6[%c0_108, %c0_109] : memref<8x128xf32, #tpu.memory_space<vmem>>, vector<8x128xf32>
    tpu.vector_store %arg6[%c0_108, %c0_109], %215 {strides = array<i32>} : memref<8x128xf32, #tpu.memory_space<vmem>>, vector<8x128xf32>,
    %220 = arith.index_cast %c4_i32 : i32 to index
    %c0_110 = arith.constant 0 : index
    %c0_111 = arith.constant 0 : index
    %221 = vector.load %arg4[%220, %c0_110, %c0_111] : memref<8x8x128xf32, #tpu.memory_space<vmem>>, vector<1x8x128xf32>
    %222 = vector.shape_cast %221 : vector<1x8x128xf32> to vector<8x128xf32>
    %223 = vector.shape_cast %217 : vector<8x128xf32> to vector<1x8x128xf32>
    tpu.vector_store %arg4[%220, %c0_110, %c0_111], %223 {strides = array<i32>} : memref<8x8x128xf32, #tpu.memory_space<vmem>>, vector<1x8x128xf32>,
    %c5_i32 = arith.constant 5 : i32
    %c0_112 = arith.constant 0 : index
    %c0_113 = arith.constant 0 : index
    %224 = vector.load %arg5[%c0_112, %c0_113] : memref<8x128xf32, #tpu.memory_space<vmem>>, vector<8x128xf32>
    %c0_114 = arith.constant 0 : index
    %c0_115 = arith.constant 0 : index
    %225 = vector.load %arg6[%c0_114, %c0_115] : memref<8x128xf32, #tpu.memory_space<vmem>>, vector<8x128xf32>
    %226 = arith.index_cast %c5_i32 : i32 to index
    %c0_116 = arith.constant 0 : index
    %c0_117 = arith.constant 0 : index
    %227 = vector.load %arg2[%226, %c0_116, %c0_117] : memref<8x8x512xf32, #tpu.memory_space<vmem>>, vector<1x8x512xf32>
    %228 = vector.shape_cast %227 : vector<1x8x512xf32> to vector<8x512xf32>
    %cst_118 = arith.constant dense<0.000000e+00> : vector<8x512xf32>
    %229 = tpu.matmul %224, %3, %cst_118 {dimension_numbers = #tpu.dot_dimension_numbers<[1], [0], [0], [1], [0, 0, 1, 1], [], []>} : vector<8x128xf32>, vector<128x512xf32>, vector<8x512xf32> -> vector<8x512xf32>
    %230 = arith.addf %228, %229 : vector<8x512xf32>
    %231 = vector.extract_strided_slice %230 {offsets = [0, 0], sizes = [8, 128], strides = [1, 1]} : vector<8x512xf32> to vector<8x128xf32>
    %cst_119 = arith.constant 5.000000e-01 : f32
    %232 = vector.broadcast %cst_119 : f32 to vector<8x128xf32>
    %233 = arith.mulf %232, %231 : vector<8x128xf32>
    %234 = math.tanh %233 : vector<8x128xf32>
    %cst_120 = arith.constant 1.000000e+00 : f32
    %235 = vector.broadcast %cst_120 : f32 to vector<8x128xf32>
    %236 = arith.addf %234, %235 : vector<8x128xf32>
    %cst_121 = arith.constant 5.000000e-01 : f32
    %237 = vector.broadcast %cst_121 : f32 to vector<8x128xf32>
    %238 = arith.mulf %237, %236 : vector<8x128xf32>
    %239 = vector.extract_strided_slice %230 {offsets = [0, 128], sizes = [8, 128], strides = [1, 1]} : vector<8x512xf32> to vector<8x128xf32>
    %cst_122 = arith.constant 5.000000e-01 : f32
    %240 = vector.broadcast %cst_122 : f32 to vector<8x128xf32>
    %241 = arith.mulf %240, %239 : vector<8x128xf32>
    %242 = math.tanh %241 : vector<8x128xf32>
    %cst_123 = arith.constant 1.000000e+00 : f32
    %243 = vector.broadcast %cst_123 : f32 to vector<8x128xf32>
    %244 = arith.addf %242, %243 : vector<8x128xf32>
    %cst_124 = arith.constant 5.000000e-01 : f32
    %245 = vector.broadcast %cst_124 : f32 to vector<8x128xf32>
    %246 = arith.mulf %245, %244 : vector<8x128xf32>
    %247 = vector.extract_strided_slice %230 {offsets = [0, 256], sizes = [8, 128], strides = [1, 1]} : vector<8x512xf32> to vector<8x128xf32>
    %248 = math.tanh %247 : vector<8x128xf32>
    %249 = vector.extract_strided_slice %230 {offsets = [0, 384], sizes = [8, 128], strides = [1, 1]} : vector<8x512xf32> to vector<8x128xf32>
    %cst_125 = arith.constant 5.000000e-01 : f32
    %250 = vector.broadcast %cst_125 : f32 to vector<8x128xf32>
    %251 = arith.mulf %250, %249 : vector<8x128xf32>
    %252 = math.tanh %251 : vector<8x128xf32>
    %cst_126 = arith.constant 1.000000e+00 : f32
    %253 = vector.broadcast %cst_126 : f32 to vector<8x128xf32>
    %254 = arith.addf %252, %253 : vector<8x128xf32>
    %cst_127 = arith.constant 5.000000e-01 : f32
    %255 = vector.broadcast %cst_127 : f32 to vector<8x128xf32>
    %256 = arith.mulf %255, %254 : vector<8x128xf32>
    %257 = arith.mulf %246, %225 : vector<8x128xf32>
    %258 = arith.mulf %238, %248 : vector<8x128xf32>
    %259 = arith.addf %257, %258 : vector<8x128xf32>
    %260 = math.tanh %259 : vector<8x128xf32>
    %261 = arith.mulf %256, %260 : vector<8x128xf32>
    %c0_128 = arith.constant 0 : index
    %c0_129 = arith.constant 0 : index
    %262 = vector.load %arg5[%c0_128, %c0_129] : memref<8x128xf32, #tpu.memory_space<vmem>>, vector<8x128xf32>
    tpu.vector_store %arg5[%c0_128, %c0_129], %261 {strides = array<i32>} : memref<8x128xf32, #tpu.memory_space<vmem>>, vector<8x128xf32>,
    %c0_130 = arith.constant 0 : index
    %c0_131 = arith.constant 0 : index
    %263 = vector.load %arg6[%c0_130, %c0_131] : memref<8x128xf32, #tpu.memory_space<vmem>>, vector<8x128xf32>
    tpu.vector_store %arg6[%c0_130, %c0_131], %259 {strides = array<i32>} : memref<8x128xf32, #tpu.memory_space<vmem>>, vector<8x128xf32>,
    %264 = arith.index_cast %c5_i32 : i32 to index
    %c0_132 = arith.constant 0 : index
    %c0_133 = arith.constant 0 : index
    %265 = vector.load %arg4[%264, %c0_132, %c0_133] : memref<8x8x128xf32, #tpu.memory_space<vmem>>, vector<1x8x128xf32>
    %266 = vector.shape_cast %265 : vector<1x8x128xf32> to vector<8x128xf32>
    %267 = vector.shape_cast %261 : vector<8x128xf32> to vector<1x8x128xf32>
    tpu.vector_store %arg4[%264, %c0_132, %c0_133], %267 {strides = array<i32>} : memref<8x8x128xf32, #tpu.memory_space<vmem>>, vector<1x8x128xf32>,
    %c6_i32 = arith.constant 6 : i32
    %c0_134 = arith.constant 0 : index
    %c0_135 = arith.constant 0 : index
    %268 = vector.load %arg5[%c0_134, %c0_135] : memref<8x128xf32, #tpu.memory_space<vmem>>, vector<8x128xf32>
    %c0_136 = arith.constant 0 : index
    %c0_137 = arith.constant 0 : index
    %269 = vector.load %arg6[%c0_136, %c0_137] : memref<8x128xf32, #tpu.memory_space<vmem>>, vector<8x128xf32>
    %270 = arith.index_cast %c6_i32 : i32 to index
    %c0_138 = arith.constant 0 : index
    %c0_139 = arith.constant 0 : index
    %271 = vector.load %arg2[%270, %c0_138, %c0_139] : memref<8x8x512xf32, #tpu.memory_space<vmem>>, vector<1x8x512xf32>
    %272 = vector.shape_cast %271 : vector<1x8x512xf32> to vector<8x512xf32>
    %cst_140 = arith.constant dense<0.000000e+00> : vector<8x512xf32>
    %273 = tpu.matmul %268, %3, %cst_140 {dimension_numbers = #tpu.dot_dimension_numbers<[1], [0], [0], [1], [0, 0, 1, 1], [], []>} : vector<8x128xf32>, vector<128x512xf32>, vector<8x512xf32> -> vector<8x512xf32>
    %274 = arith.addf %272, %273 : vector<8x512xf32>
    %275 = vector.extract_strided_slice %274 {offsets = [0, 0], sizes = [8, 128], strides = [1, 1]} : vector<8x512xf32> to vector<8x128xf32>
    %cst_141 = arith.constant 5.000000e-01 : f32
    %276 = vector.broadcast %cst_141 : f32 to vector<8x128xf32>
    %277 = arith.mulf %276, %275 : vector<8x128xf32>
    %278 = math.tanh %277 : vector<8x128xf32>
    %cst_142 = arith.constant 1.000000e+00 : f32
    %279 = vector.broadcast %cst_142 : f32 to vector<8x128xf32>
    %280 = arith.addf %278, %279 : vector<8x128xf32>
    %cst_143 = arith.constant 5.000000e-01 : f32
    %281 = vector.broadcast %cst_143 : f32 to vector<8x128xf32>
    %282 = arith.mulf %281, %280 : vector<8x128xf32>
    %283 = vector.extract_strided_slice %274 {offsets = [0, 128], sizes = [8, 128], strides = [1, 1]} : vector<8x512xf32> to vector<8x128xf32>
    %cst_144 = arith.constant 5.000000e-01 : f32
    %284 = vector.broadcast %cst_144 : f32 to vector<8x128xf32>
    %285 = arith.mulf %284, %283 : vector<8x128xf32>
    %286 = math.tanh %285 : vector<8x128xf32>
    %cst_145 = arith.constant 1.000000e+00 : f32
    %287 = vector.broadcast %cst_145 : f32 to vector<8x128xf32>
    %288 = arith.addf %286, %287 : vector<8x128xf32>
    %cst_146 = arith.constant 5.000000e-01 : f32
    %289 = vector.broadcast %cst_146 : f32 to vector<8x128xf32>
    %290 = arith.mulf %289, %288 : vector<8x128xf32>
    %291 = vector.extract_strided_slice %274 {offsets = [0, 256], sizes = [8, 128], strides = [1, 1]} : vector<8x512xf32> to vector<8x128xf32>
    %292 = math.tanh %291 : vector<8x128xf32>
    %293 = vector.extract_strided_slice %274 {offsets = [0, 384], sizes = [8, 128], strides = [1, 1]} : vector<8x512xf32> to vector<8x128xf32>
    %cst_147 = arith.constant 5.000000e-01 : f32
    %294 = vector.broadcast %cst_147 : f32 to vector<8x128xf32>
    %295 = arith.mulf %294, %293 : vector<8x128xf32>
    %296 = math.tanh %295 : vector<8x128xf32>
    %cst_148 = arith.constant 1.000000e+00 : f32
    %297 = vector.broadcast %cst_148 : f32 to vector<8x128xf32>
    %298 = arith.addf %296, %297 : vector<8x128xf32>
    %cst_149 = arith.constant 5.000000e-01 : f32
    %299 = vector.broadcast %cst_149 : f32 to vector<8x128xf32>
    %300 = arith.mulf %299, %298 : vector<8x128xf32>
    %301 = arith.mulf %290, %269 : vector<8x128xf32>
    %302 = arith.mulf %282, %292 : vector<8x128xf32>
    %303 = arith.addf %301, %302 : vector<8x128xf32>
    %304 = math.tanh %303 : vector<8x128xf32>
    %305 = arith.mulf %300, %304 : vector<8x128xf32>
    %c0_150 = arith.constant 0 : index
    %c0_151 = arith.constant 0 : index
    %306 = vector.load %arg5[%c0_150, %c0_151] : memref<8x128xf32, #tpu.memory_space<vmem>>, vector<8x128xf32>
    tpu.vector_store %arg5[%c0_150, %c0_151], %305 {strides = array<i32>} : memref<8x128xf32, #tpu.memory_space<vmem>>, vector<8x128xf32>,
    %c0_152 = arith.constant 0 : index
    %c0_153 = arith.constant 0 : index
    %307 = vector.load %arg6[%c0_152, %c0_153] : memref<8x128xf32, #tpu.memory_space<vmem>>, vector<8x128xf32>
    tpu.vector_store %arg6[%c0_152, %c0_153], %303 {strides = array<i32>} : memref<8x128xf32, #tpu.memory_space<vmem>>, vector<8x128xf32>,
    %308 = arith.index_cast %c6_i32 : i32 to index
    %c0_154 = arith.constant 0 : index
    %c0_155 = arith.constant 0 : index
    %309 = vector.load %arg4[%308, %c0_154, %c0_155] : memref<8x8x128xf32, #tpu.memory_space<vmem>>, vector<1x8x128xf32>
    %310 = vector.shape_cast %309 : vector<1x8x128xf32> to vector<8x128xf32>
    %311 = vector.shape_cast %305 : vector<8x128xf32> to vector<1x8x128xf32>
    tpu.vector_store %arg4[%308, %c0_154, %c0_155], %311 {strides = array<i32>} : memref<8x8x128xf32, #tpu.memory_space<vmem>>, vector<1x8x128xf32>,
    %c7_i32 = arith.constant 7 : i32
    %c0_156 = arith.constant 0 : index
    %c0_157 = arith.constant 0 : index
    %312 = vector.load %arg5[%c0_156, %c0_157] : memref<8x128xf32, #tpu.memory_space<vmem>>, vector<8x128xf32>
    %c0_158 = arith.constant 0 : index
    %c0_159 = arith.constant 0 : index
    %313 = vector.load %arg6[%c0_158, %c0_159] : memref<8x128xf32, #tpu.memory_space<vmem>>, vector<8x128xf32>
    %314 = arith.index_cast %c7_i32 : i32 to index
    %c0_160 = arith.constant 0 : index
    %c0_161 = arith.constant 0 : index
    %315 = vector.load %arg2[%314, %c0_160, %c0_161] : memref<8x8x512xf32, #tpu.memory_space<vmem>>, vector<1x8x512xf32>
    %316 = vector.shape_cast %315 : vector<1x8x512xf32> to vector<8x512xf32>
    %cst_162 = arith.constant dense<0.000000e+00> : vector<8x512xf32>
    %317 = tpu.matmul %312, %3, %cst_162 {dimension_numbers = #tpu.dot_dimension_numbers<[1], [0], [0], [1], [0, 0, 1, 1], [], []>} : vector<8x128xf32>, vector<128x512xf32>, vector<8x512xf32> -> vector<8x512xf32>
    %318 = arith.addf %316, %317 : vector<8x512xf32>
    %319 = vector.extract_strided_slice %318 {offsets = [0, 0], sizes = [8, 128], strides = [1, 1]} : vector<8x512xf32> to vector<8x128xf32>
    %cst_163 = arith.constant 5.000000e-01 : f32
    %320 = vector.broadcast %cst_163 : f32 to vector<8x128xf32>
    %321 = arith.mulf %320, %319 : vector<8x128xf32>
    %322 = math.tanh %321 : vector<8x128xf32>
    %cst_164 = arith.constant 1.000000e+00 : f32
    %323 = vector.broadcast %cst_164 : f32 to vector<8x128xf32>
    %324 = arith.addf %322, %323 : vector<8x128xf32>
    %cst_165 = arith.constant 5.000000e-01 : f32
    %325 = vector.broadcast %cst_165 : f32 to vector<8x128xf32>
    %326 = arith.mulf %325, %324 : vector<8x128xf32>
    %327 = vector.extract_strided_slice %318 {offsets = [0, 128], sizes = [8, 128], strides = [1, 1]} : vector<8x512xf32> to vector<8x128xf32>
    %cst_166 = arith.constant 5.000000e-01 : f32
    %328 = vector.broadcast %cst_166 : f32 to vector<8x128xf32>
    %329 = arith.mulf %328, %327 : vector<8x128xf32>
    %330 = math.tanh %329 : vector<8x128xf32>
    %cst_167 = arith.constant 1.000000e+00 : f32
    %331 = vector.broadcast %cst_167 : f32 to vector<8x128xf32>
    %332 = arith.addf %330, %331 : vector<8x128xf32>
    %cst_168 = arith.constant 5.000000e-01 : f32
    %333 = vector.broadcast %cst_168 : f32 to vector<8x128xf32>
    %334 = arith.mulf %333, %332 : vector<8x128xf32>
    %335 = vector.extract_strided_slice %318 {offsets = [0, 256], sizes = [8, 128], strides = [1, 1]} : vector<8x512xf32> to vector<8x128xf32>
    %336 = math.tanh %335 : vector<8x128xf32>
    %337 = vector.extract_strided_slice %318 {offsets = [0, 384], sizes = [8, 128], strides = [1, 1]} : vector<8x512xf32> to vector<8x128xf32>
    %cst_169 = arith.constant 5.000000e-01 : f32
    %338 = vector.broadcast %cst_169 : f32 to vector<8x128xf32>
    %339 = arith.mulf %338, %337 : vector<8x128xf32>
    %340 = math.tanh %339 : vector<8x128xf32>
    %cst_170 = arith.constant 1.000000e+00 : f32
    %341 = vector.broadcast %cst_170 : f32 to vector<8x128xf32>
    %342 = arith.addf %340, %341 : vector<8x128xf32>
    %cst_171 = arith.constant 5.000000e-01 : f32
    %343 = vector.broadcast %cst_171 : f32 to vector<8x128xf32>
    %344 = arith.mulf %343, %342 : vector<8x128xf32>
    %345 = arith.mulf %334, %313 : vector<8x128xf32>
    %346 = arith.mulf %326, %336 : vector<8x128xf32>
    %347 = arith.addf %345, %346 : vector<8x128xf32>
    %348 = math.tanh %347 : vector<8x128xf32>
    %349 = arith.mulf %344, %348 : vector<8x128xf32>
    %c0_172 = arith.constant 0 : index
    %c0_173 = arith.constant 0 : index
    %350 = vector.load %arg5[%c0_172, %c0_173] : memref<8x128xf32, #tpu.memory_space<vmem>>, vector<8x128xf32>
    tpu.vector_store %arg5[%c0_172, %c0_173], %349 {strides = array<i32>} : memref<8x128xf32, #tpu.memory_space<vmem>>, vector<8x128xf32>,
    %c0_174 = arith.constant 0 : index
    %c0_175 = arith.constant 0 : index
    %351 = vector.load %arg6[%c0_174, %c0_175] : memref<8x128xf32, #tpu.memory_space<vmem>>, vector<8x128xf32>
    tpu.vector_store %arg6[%c0_174, %c0_175], %347 {strides = array<i32>} : memref<8x128xf32, #tpu.memory_space<vmem>>, vector<8x128xf32>,
    %352 = arith.index_cast %c7_i32 : i32 to index
    %c0_176 = arith.constant 0 : index
    %c0_177 = arith.constant 0 : index
    %353 = vector.load %arg4[%352, %c0_176, %c0_177] : memref<8x8x128xf32, #tpu.memory_space<vmem>>, vector<1x8x128xf32>
    %354 = vector.shape_cast %353 : vector<1x8x128xf32> to vector<8x128xf32>
    %355 = vector.shape_cast %349 : vector<8x128xf32> to vector<1x8x128xf32>
    tpu.vector_store %arg4[%352, %c0_176, %c0_177], %355 {strides = array<i32>} : memref<8x8x128xf32, #tpu.memory_space<vmem>>, vector<1x8x128xf32>,
    %c8_i32 = arith.constant 8 : i32
    return
  }
  func.func @transform_0(%arg0: i32, %arg1: i32) -> (i32, i32, i32) {
    %c0_i32 = arith.constant 0 : i32
    %c0_i32_0 = arith.constant 0 : i32
    return %arg1, %arg0, %c0_i32 : i32, i32, i32
  }
  func.func @transform_1(%arg0: i32, %arg1: i32) -> (i32, i32) {
    %c0_i32 = arith.constant 0 : i32
    %c0_i32_0 = arith.constant 0 : i32
    %c0_i32_1 = arith.constant 0 : i32
    return %c0_i32, %c0_i32_0 : i32, i32
  }
  func.func @transform_2(%arg0: i32, %arg1: i32) -> (i32, i32, i32) {
    %c0_i32 = arith.constant 0 : i32
    %c0_i32_0 = arith.constant 0 : i32
    return %arg1, %arg0, %c0_i32 : i32, i32, i32
  }
}

</mosaic_0001>

<llo_original>
// kernel: decoder_rnn_forward.5
$region0: #{decoder_rnn_forward.5}
  #allocation0 [shape = 'u32[]', space=smem, size = 0x4, offset = 0x4, fixed_abs, tag = 'smem constant byte address 0x4 - core index']
  #allocation1 [shape = 'u32[72,128]{1,0:T(1,128)}', space=vmem, size = 0x9000, scoped, tag = 'internal scratch']
  %s0 = inlined_call_operand.vmem [shape: f32[64,128], index: 0, kind: input, shape index: {}]
  %s1 = inlined_call_operand.vmem [shape: f32[128,128], index: 1, kind: input, shape index: {}]
  %s2 = inlined_call_operand.vmem [shape: f32[64,128], index: 2, kind: output, shape index: {}]
  %s3 = sld [smem:[#allocation0]]
  $region18: #{decoder_rnn_forward.5} parent=0
    _
  %s5 = ssub.s32 1, %s3
  %s6 = scalar_select 0, %s5, %s3
  // Predicated region
  $region2: #{decoder_rnn_forward.5} parent=0 // pred_check
    _
  $region3: #{decoder_rnn_forward.5} parent=0 // pred_check_branch
    %8 = sbr.rel (0) target = $region5
  $region4: #{decoder_rnn_forward.5} parent=0 // pred_region
    _
  $region5: #{decoder_rnn_forward.5} parent=0 // pred_fallthru
    _
  // Predicated region
  $region6: #{decoder_rnn_forward.5} parent=0 // pred_check
    _
  $region7: #{decoder_rnn_forward.5} parent=0 // pred_check_branch
    %10 = sbr.rel (0) target = $region9
  $region8: #{decoder_rnn_forward.5} parent=0 // pred_region
    _
  $region9: #{decoder_rnn_forward.5} parent=0 // pred_fallthru
    _
  %v11 = vld [vmem:[%s1] sm:$0xff]
  %v12 = vld [vmem:[%s1 + $0x8] sm:$0xff]
  %v13 = vld [vmem:[%s1 + $0x10] sm:$0xff]
  %v14 = vld [vmem:[%s1 + $0x18] sm:$0xff]
  %v15 = vld [vmem:[%s1 + $0x20] sm:$0xff]
  %v16 = vld [vmem:[%s1 + $0x28] sm:$0xff]
  %v17 = vld [vmem:[%s1 + $0x30] sm:$0xff]
  %v18 = vld [vmem:[%s1 + $0x38] sm:$0xff]
  %v19 = vld [vmem:[%s1 + $0x40] sm:$0xff]
  %v20 = vld [vmem:[%s1 + $0x48] sm:$0xff]
  %v21 = vld [vmem:[%s1 + $0x50] sm:$0xff]
  %v22 = vld [vmem:[%s1 + $0x58] sm:$0xff]
  %v23 = vld [vmem:[%s1 + $0x60] sm:$0xff]
  %v24 = vld [vmem:[%s1 + $0x68] sm:$0xff]
  %v25 = vld [vmem:[%s1 + $0x70] sm:$0xff]
  %v26 = vld [vmem:[%s1 + $0x78] sm:$0xff]
  %v27 = vld [vmem:[%s0] sm:$0xff]
  %v28 = vld [vmem:[%s0 + $0x8] sm:$0xff]
  %v29 = vld [vmem:[%s0 + $0x10] sm:$0xff]
  %v30 = vld [vmem:[%s0 + $0x18] sm:$0xff]
  %v31 = vld [vmem:[%s0 + $0x20] sm:$0xff]
  %v32 = vld [vmem:[%s0 + $0x28] sm:$0xff]
  %v33 = vld [vmem:[%s0 + $0x30] sm:$0xff]
  %v34 = vld [vmem:[%s0 + $0x38] sm:$0xff]
  %35 = vmatpush.msra.mxu0 %v26
  %36 = vmatpush.msra.mxu0 %v25
  %37 = vmatpush.msra.mxu0 %v24
  %38 = vmatpush.msra.mxu0 %v23
  %39 = vmatpush.msra.mxu0 %v22
  %40 = vmatpush.msra.mxu0 %v21
  %41 = vmatpush.msra.mxu0 %v20
  %42 = vmatpush.msra.mxu0 %v19
  %43 = vmatpush.msra.mxu0 %v18
  %44 = vmatpush.msra.mxu0 %v17
  %45 = vmatpush.msra.mxu0 %v16
  %46 = vmatpush.msra.mxu0 %v15
  %47 = vmatpush.msra.mxu0 %v14
  %48 = vmatpush.msra.mxu0 %v13
  %49 = vmatpush.msra.mxu0 %v12
  %50 = vmatpush.msra.mxu0 %v11
  %51 = vmatmul.f32.gmra.mxu0 %v27
  %v52 = vpop.f32.mrf.mxu0
  %v53 = vadd.f32 0.0, %v52
  %54 = vmatmul.f32.gmra.mxu0 %v28
  %v55 = vpop.f32.mrf.mxu0
  %v56 = vadd.f32 0.0, %v55
  %57 = vmatmul.f32.gmra.mxu0 %v29
  %v58 = vpop.f32.mrf.mxu0
  %v59 = vadd.f32 0.0, %v58
  %60 = vmatmul.f32.gmra.mxu0 %v30
  %v61 = vpop.f32.mrf.mxu0
  %v62 = vadd.f32 0.0, %v61
  %63 = vmatmul.f32.gmra.mxu0 %v31
  %v64 = vpop.f32.mrf.mxu0
  %v65 = vadd.f32 0.0, %v64
  %66 = vmatmul.f32.gmra.mxu0 %v32
  %v67 = vpop.f32.mrf.mxu0
  %v68 = vadd.f32 0.0, %v67
  %69 = vmatmul.f32.gmra.mxu0 %v33
  %v70 = vpop.f32.mrf.mxu0
  %v71 = vadd.f32 0.0, %v70
  %72 = vmatmul.f32.gmra.mxu0 %v34
  %v73 = vpop.f32.mrf.mxu0
  %v74 = vadd.f32 0.0, %v73
  %75 = vdwg.mxu0
  %76 = vst [vmem:[%s2] sm:$0xff] %v53
  %77 = vst [vmem:[%s2 + $0x8] sm:$0xff] %v56
  %78 = vst [vmem:[%s2 + $0x10] sm:$0xff] %v59
  %79 = vst [vmem:[%s2 + $0x18] sm:$0xff] %v62
  %80 = vst [vmem:[%s2 + $0x20] sm:$0xff] %v65
  %81 = vst [vmem:[%s2 + $0x28] sm:$0xff] %v68
  %82 = vst [vmem:[%s2 + $0x30] sm:$0xff] %v71
  %83 = vst [vmem:[%s2 + $0x38] sm:$0xff] %v74
  // Predicated region
  $region10: #{decoder_rnn_forward.5} parent=0 // pred_check
    _
  $region11: #{decoder_rnn_forward.5} parent=0 // pred_check_branch
    %85 = sbr.rel (0) target = $region13
  $region12: #{decoder_rnn_forward.5} parent=0 // pred_region
    _
  $region13: #{decoder_rnn_forward.5} parent=0 // pred_fallthru
    _
  // Predicated region
  $region14: #{decoder_rnn_forward.5} parent=0 // pred_check
    _
  $region15: #{decoder_rnn_forward.5} parent=0 // pred_check_branch
    %87 = sbr.rel (0) target = $region17
  $region16: #{decoder_rnn_forward.5} parent=0 // pred_region
    _
  $region17: #{decoder_rnn_forward.5} parent=0 // pred_fallthru
    _

// kernel: decoder_rnn_forward.3
$region0: #{decoder_rnn_forward.3}
  #allocation0 [shape = 'u32[]', space=smem, size = 0x4, offset = 0x4, fixed_abs, tag = 'smem constant byte address 0x4 - core index']
  #allocation1 [shape = 'u32[72,128]{1,0:T(1,128)}', space=vmem, size = 0x9000, scoped, tag = 'internal scratch']
  %s0 = inlined_call_operand.vmem [shape: f32[64,32], index: 0, kind: input, shape index: {}]
  %s1 = inlined_call_operand.vmem [shape: f32[32,512], index: 1, kind: input, shape index: {}]
  %s2 = inlined_call_operand.vmem [shape: f32[1,512], index: 2, kind: input, shape index: {}]
  %s3 = inlined_call_operand.vmem [shape: f32[64,512], index: 3, kind: output, shape index: {}]
  %s4 = sld [smem:[#allocation0]]
  $region22: #{decoder_rnn_forward.3} parent=0
    _
  %s6 = ssub.s32 1, %s4
  %s7 = scalar_select 0, %s6, %s4
  // Predicated region
  $region2: #{decoder_rnn_forward.3} parent=0 // pred_check
    _
  $region3: #{decoder_rnn_forward.3} parent=0 // pred_check_branch
    %9 = sbr.rel (0) target = $region5
  $region4: #{decoder_rnn_forward.3} parent=0 // pred_region
    _
  $region5: #{decoder_rnn_forward.3} parent=0 // pred_fallthru
    _
  // Predicated region
  $region6: #{decoder_rnn_forward.3} parent=0 // pred_check
    _
  $region7: #{decoder_rnn_forward.3} parent=0 // pred_check_branch
    %11 = sbr.rel (0) target = $region9
  $region8: #{decoder_rnn_forward.3} parent=0 // pred_region
    _
  $region9: #{decoder_rnn_forward.3} parent=0 // pred_fallthru
    _
  // Predicated region
  $region10: #{decoder_rnn_forward.3} parent=0 // pred_check
    _
  $region11: #{decoder_rnn_forward.3} parent=0 // pred_check_branch
    %13 = sbr.rel (0) target = $region13
  $region12: #{decoder_rnn_forward.3} parent=0 // pred_region
    _
  $region13: #{decoder_rnn_forward.3} parent=0 // pred_fallthru
    _
  %v14 = vld [vmem:[%s1] sm:$0xff]
  %v15 = vld [vmem:[%s1 + $0x8] sm:$0xff]
  %v16 = vld [vmem:[%s1 + $0x10] sm:$0xff]
  %v17 = vld [vmem:[%s1 + $0x18] sm:$0xff]
  %v18 = vld [vmem:[%s1 + $0x20] sm:$0xff]
  %v19 = vld [vmem:[%s1 + $0x28] sm:$0xff]
  %v20 = vld [vmem:[%s1 + $0x30] sm:$0xff]
  %v21 = vld [vmem:[%s1 + $0x38] sm:$0xff]
  %v22 = vld [vmem:[%s1 + $0x40] sm:$0xff]
  %v23 = vld [vmem:[%s1 + $0x48] sm:$0xff]
  %v24 = vld [vmem:[%s1 + $0x50] sm:$0xff]
  %v25 = vld [vmem:[%s1 + $0x58] sm:$0xff]
  %v26 = vld [vmem:[%s1 + $0x60] sm:$0xff]
  %v27 = vld [vmem:[%s1 + $0x68] sm:$0xff]
  %v28 = vld [vmem:[%s1 + $0x70] sm:$0xff]
  %v29 = vld [vmem:[%s1 + $0x78] sm:$0xff]
  %v30 = vld [vmem:[%s0] sm:$0xff]
  %v31 = vld [vmem:[%s0 + $0x8] sm:$0xff]
  %v32 = vld [vmem:[%s0 + $0x10] sm:$0xff]
  %v33 = vld [vmem:[%s0 + $0x18] sm:$0xff]
  %v34 = vld [vmem:[%s0 + $0x20] sm:$0xff]
  %v35 = vld [vmem:[%s0 + $0x28] sm:$0xff]
  %v36 = vld [vmem:[%s0 + $0x30] sm:$0xff]
  %v37 = vld [vmem:[%s0 + $0x38] sm:$0xff]
  %v38 = vld [vmem:[%s2] sm:$0xf]
  %v40 = vperm.slane %v38, 0
  %v41 = vperm.slane %v38, 1
  %v42 = vperm.slane %v38, 2
  %v43 = vperm.slane %v38, 3
  %vm48 = vcmask 261120
  %v50 = vsel %vm48, %v30, 0
  %v53 = vsel %vm48, %v31, 0
  %v56 = vsel %vm48, %v32, 0
  %v59 = vsel %vm48, %v33, 0
  %v62 = vsel %vm48, %v34, 0
  %v65 = vsel %vm48, %v35, 0
  %v68 = vsel %vm48, %v36, 0
  %v71 = vsel %vm48, %v37, 0
  %73 = vmatpush.msra.mxu0 0.0
  %74 = vmatpush.msra.mxu0 0.0
  %75 = vmatpush.msra.mxu0 0.0
  %76 = vmatpush.msra.mxu0 0.0
  %77 = vmatpush.msra.mxu0 0.0
  %78 = vmatpush.msra.mxu0 0.0
  %79 = vmatpush.msra.mxu0 0.0
  %80 = vmatpush.msra.mxu0 0.0
  %81 = vmatpush.msra.mxu0 0.0
  %82 = vmatpush.msra.mxu0 0.0
  %83 = vmatpush.msra.mxu0 0.0
  %84 = vmatpush.msra.mxu0 0.0
  %85 = vmatpush.msra.mxu0 %v26
  %86 = vmatpush.msra.mxu0 %v22
  %87 = vmatpush.msra.mxu0 %v18
  %88 = vmatpush.msra.mxu0 %v14
  %89 = vmatmul.f32.gmra.mxu0 %v50
  %v90 = vpop.f32.mrf.mxu0
  %v91 = vadd.f32 %v40, %v90
  %92 = vmatmul.f32.gmra.mxu0 %v53
  %v93 = vpop.f32.mrf.mxu0
  %v94 = vadd.f32 %v40, %v93
  %95 = vmatmul.f32.gmra.mxu0 %v56
  %v96 = vpop.f32.mrf.mxu0
  %v97 = vadd.f32 %v40, %v96
  %98 = vmatmul.f32.gmra.mxu0 %v59
  %v99 = vpop.f32.mrf.mxu0
  %v100 = vadd.f32 %v40, %v99
  %101 = vmatmul.f32.gmra.mxu0 %v62
  %v102 = vpop.f32.mrf.mxu0
  %v103 = vadd.f32 %v40, %v102
  %104 = vmatmul.f32.gmra.mxu0 %v65
  %v105 = vpop.f32.mrf.mxu0
  %v106 = vadd.f32 %v40, %v105
  %107 = vmatmul.f32.gmra.mxu0 %v68
  %v108 = vpop.f32.mrf.mxu0
  %v109 = vadd.f32 %v40, %v108
  %110 = vmatmul.f32.gmra.mxu0 %v71
  %v111 = vpop.f32.mrf.mxu0
  %v112 = vadd.f32 %v40, %v111
  %113 = vdwg.mxu0
  %114 = vmatpush.msra.mxu0 0.0
  %115 = vmatpush.msra.mxu0 0.0
  %116 = vmatpush.msra.mxu0 0.0
  %117 = vmatpush.msra.mxu0 0.0
  %118 = vmatpush.msra.mxu0 0.0
  %119 = vmatpush.msra.mxu0 0.0
  %120 = vmatpush.msra.mxu0 0.0
  %121 = vmatpush.msra.mxu0 0.0
  %122 = vmatpush.msra.mxu0 0.0
  %123 = vmatpush.msra.mxu0 0.0
  %124 = vmatpush.msra.mxu0 0.0
  %125 = vmatpush.msra.mxu0 0.0
  %126 = vmatpush.msra.mxu0 %v27
  %127 = vmatpush.msra.mxu0 %v23
  %128 = vmatpush.msra.mxu0 %v19
  %129 = vmatpush.msra.mxu0 %v15
  %130 = vmatmul.f32.gmra.mxu0 %v50
  %v131 = vpop.f32.mrf.mxu0
  %v132 = vadd.f32 %v41, %v131
  %133 = vmatmul.f32.gmra.mxu0 %v53
  %v134 = vpop.f32.mrf.mxu0
  %v135 = vadd.f32 %v41, %v134
  %136 = vmatmul.f32.gmra.mxu0 %v56
  %v137 = vpop.f32.mrf.mxu0
  %v138 = vadd.f32 %v41, %v137
  %139 = vmatmul.f32.gmra.mxu0 %v59
  %v140 = vpop.f32.mrf.mxu0
  %v141 = vadd.f32 %v41, %v140
  %142 = vmatmul.f32.gmra.mxu0 %v62
  %v143 = vpop.f32.mrf.mxu0
  %v144 = vadd.f32 %v41, %v143
  %145 = vmatmul.f32.gmra.mxu0 %v65
  %v146 = vpop.f32.mrf.mxu0
  %v147 = vadd.f32 %v41, %v146
  %148 = vmatmul.f32.gmra.mxu0 %v68
  %v149 = vpop.f32.mrf.mxu0
  %v150 = vadd.f32 %v41, %v149
  %151 = vmatmul.f32.gmra.mxu0 %v71
  %v152 = vpop.f32.mrf.mxu0
  %v153 = vadd.f32 %v41, %v152
  %154 = vdwg.mxu0
  %155 = vmatpush.msra.mxu0 0.0
  %156 = vmatpush.msra.mxu0 0.0
  %157 = vmatpush.msra.mxu0 0.0
  %158 = vmatpush.msra.mxu0 0.0
  %159 = vmatpush.msra.mxu0 0.0
  %160 = vmatpush.msra.mxu0 0.0
  %161 = vmatpush.msra.mxu0 0.0
  %162 = vmatpush.msra.mxu0 0.0
  %163 = vmatpush.msra.mxu0 0.0
  %164 = vmatpush.msra.mxu0 0.0
  %165 = vmatpush.msra.mxu0 0.0
  %166 = vmatpush.msra.mxu0 0.0
  %167 = vmatpush.msra.mxu0 %v28
  %168 = vmatpush.msra.mxu0 %v24
  %169 = vmatpush.msra.mxu0 %v20
  %170 = vmatpush.msra.mxu0 %v16
  %171 = vmatmul.f32.gmra.mxu0 %v50
  %v172 = vpop.f32.mrf.mxu0
  %v173 = vadd.f32 %v42, %v172
  %174 = vmatmul.f32.gmra.mxu0 %v53
  %v175 = vpop.f32.mrf.mxu0
  %v176 = vadd.f32 %v42, %v175
  %177 = vmatmul.f32.gmra.mxu0 %v56
  %v178 = vpop.f32.mrf.mxu0
  %v179 = vadd.f32 %v42, %v178
  %180 = vmatmul.f32.gmra.mxu0 %v59
  %v181 = vpop.f32.mrf.mxu0
  %v182 = vadd.f32 %v42, %v181
  %183 = vmatmul.f32.gmra.mxu0 %v62
  %v184 = vpop.f32.mrf.mxu0
  %v185 = vadd.f32 %v42, %v184
  %186 = vmatmul.f32.gmra.mxu0 %v65
  %v187 = vpop.f32.mrf.mxu0
  %v188 = vadd.f32 %v42, %v187
  %189 = vmatmul.f32.gmra.mxu0 %v68
  %v190 = vpop.f32.mrf.mxu0
  %v191 = vadd.f32 %v42, %v190
  %192 = vmatmul.f32.gmra.mxu0 %v71
  %v193 = vpop.f32.mrf.mxu0
  %v194 = vadd.f32 %v42, %v193
  %195 = vdwg.mxu0
  %196 = vmatpush.msra.mxu0 0.0
  %197 = vmatpush.msra.mxu0 0.0
  %198 = vmatpush.msra.mxu0 0.0
  %199 = vmatpush.msra.mxu0 0.0
  %200 = vmatpush.msra.mxu0 0.0
  %201 = vmatpush.msra.mxu0 0.0
  %202 = vmatpush.msra.mxu0 0.0
  %203 = vmatpush.msra.mxu0 0.0
  %204 = vmatpush.msra.mxu0 0.0
  %205 = vmatpush.msra.mxu0 0.0
  %206 = vmatpush.msra.mxu0 0.0
  %207 = vmatpush.msra.mxu0 0.0
  %208 = vmatpush.msra.mxu0 %v29
  %209 = vmatpush.msra.mxu0 %v25
  %210 = vmatpush.msra.mxu0 %v21
  %211 = vmatpush.msra.mxu0 %v17
  %212 = vmatmul.f32.gmra.mxu0 %v50
  %v213 = vpop.f32.mrf.mxu0
  %v214 = vadd.f32 %v43, %v213
  %215 = vmatmul.f32.gmra.mxu0 %v53
  %v216 = vpop.f32.mrf.mxu0
  %v217 = vadd.f32 %v43, %v216
  %218 = vmatmul.f32.gmra.mxu0 %v56
  %v219 = vpop.f32.mrf.mxu0
  %v220 = vadd.f32 %v43, %v219
  %221 = vmatmul.f32.gmra.mxu0 %v59
  %v222 = vpop.f32.mrf.mxu0
  %v223 = vadd.f32 %v43, %v222
  %224 = vmatmul.f32.gmra.mxu0 %v62
  %v225 = vpop.f32.mrf.mxu0
  %v226 = vadd.f32 %v43, %v225
  %227 = vmatmul.f32.gmra.mxu0 %v65
  %v228 = vpop.f32.mrf.mxu0
  %v229 = vadd.f32 %v43, %v228
  %230 = vmatmul.f32.gmra.mxu0 %v68
  %v231 = vpop.f32.mrf.mxu0
  %v232 = vadd.f32 %v43, %v231
  %233 = vmatmul.f32.gmra.mxu0 %v71
  %v234 = vpop.f32.mrf.mxu0
  %v235 = vadd.f32 %v43, %v234
  %236 = vdwg.mxu0
  %237 = vst [vmem:[%s3] sm:$0xff] %v91
  %238 = vst [vmem:[%s3 + $0x8] sm:$0xff] %v132
  %239 = vst [vmem:[%s3 + $0x10] sm:$0xff] %v173
  %240 = vst [vmem:[%s3 + $0x18] sm:$0xff] %v214
  %241 = vst [vmem:[%s3 + $0x20] sm:$0xff] %v94
  %242 = vst [vmem:[%s3 + $0x28] sm:$0xff] %v135
  %243 = vst [vmem:[%s3 + $0x30] sm:$0xff] %v176
  %244 = vst [vmem:[%s3 + $0x38] sm:$0xff] %v217
  %245 = vst [vmem:[%s3 + $0x40] sm:$0xff] %v97
  %246 = vst [vmem:[%s3 + $0x48] sm:$0xff] %v138
  %247 = vst [vmem:[%s3 + $0x50] sm:$0xff] %v179
  %248 = vst [vmem:[%s3 + $0x58] sm:$0xff] %v220
  %249 = vst [vmem:[%s3 + $0x60] sm:$0xff] %v100
  %250 = vst [vmem:[%s3 + $0x68] sm:$0xff] %v141
  %251 = vst [vmem:[%s3 + $0x70] sm:$0xff] %v182
  %252 = vst [vmem:[%s3 + $0x78] sm:$0xff] %v223
  %253 = vst [vmem:[%s3 + $0x80] sm:$0xff] %v103
  %254 = vst [vmem:[%s3 + $0x88] sm:$0xff] %v144
  %255 = vst [vmem:[%s3 + $0x90] sm:$0xff] %v185
  %256 = vst [vmem:[%s3 + $0x98] sm:$0xff] %v226
  %257 = vst [vmem:[%s3 + $0xa0] sm:$0xff] %v106
  %258 = vst [vmem:[%s3 + $0xa8] sm:$0xff] %v147
  %259 = vst [vmem:[%s3 + $0xb0] sm:$0xff] %v188
  %260 = vst [vmem:[%s3 + $0xb8] sm:$0xff] %v229
  %261 = vst [vmem:[%s3 + $0xc0] sm:$0xff] %v109
  %262 = vst [vmem:[%s3 + $0xc8] sm:$0xff] %v150
  %263 = vst [vmem:[%s3 + $0xd0] sm:$0xff] %v191
  %264 = vst [vmem:[%s3 + $0xd8] sm:$0xff] %v232
  %265 = vst [vmem:[%s3 + $0xe0] sm:$0xff] %v112
  %266 = vst [vmem:[%s3 + $0xe8] sm:$0xff] %v153
  %267 = vst [vmem:[%s3 + $0xf0] sm:$0xff] %v194
  %268 = vst [vmem:[%s3 + $0xf8] sm:$0xff] %v235
  // Predicated region
  $region14: #{decoder_rnn_forward.3} parent=0 // pred_check
    _
  $region15: #{decoder_rnn_forward.3} parent=0 // pred_check_branch
    %270 = sbr.rel (0) target = $region17
  $region16: #{decoder_rnn_forward.3} parent=0 // pred_region
    _
  $region17: #{decoder_rnn_forward.3} parent=0 // pred_fallthru
    _
  // Predicated region
  $region18: #{decoder_rnn_forward.3} parent=0 // pred_check
    _
  $region19: #{decoder_rnn_forward.3} parent=0 // pred_check_branch
    %272 = sbr.rel (0) target = $region21
  $region20: #{decoder_rnn_forward.3} parent=0 // pred_region
    _
  $region21: #{decoder_rnn_forward.3} parent=0 // pred_fallthru
    _

// kernel: decoder_rnn_forward.4
$region0: #{decoder_rnn_forward.4}
  #allocation0 [shape = 'u32[]', space=smem, size = 0x4, offset = 0x4, fixed_abs, tag = 'smem constant byte address 0x4 - core index']
  #allocation1 [shape = 'u32[72,128]{1,0:T(1,128)}', space=vmem, size = 0x9000, scoped, tag = 'internal scratch']
  #allocation2 [shape = 'f32[8,128]{1,0:T(8,128)}', space=vmem, size = 0x1000, scoped, tag = 'scratch operand']
  #allocation3 [shape = 'f32[8,128]{1,0:T(8,128)}', space=vmem, size = 0x1000, scoped, tag = 'scratch operand']
  %s0 = inlined_call_operand.vmem [shape: f32[8,8,512], index: 0, kind: input, shape index: {}]
  %s1 = inlined_call_operand.hbm [shape: f32[128,512], index: 1, kind: input, shape index: {}]
  %s2 = inlined_call_operand.vmem [shape: f32[8,8,128], index: 2, kind: output, shape index: {}]
  %s3 = sld [smem:[#allocation0]]
  $region26: #{decoder_rnn_forward.4} parent=0
    _
  %s5 = ssub.s32 1, %s3
  %s6 = scalar_select 0, %s5, %s3
  $region1: #{decoder_rnn_forward.4} parent=0
    #allocation4 [shape = 'u8[262144]{0}', space=vmem, size = 0x40000, scoped, tag = 'input window, operand 1, single buffered']
    #allocation5 [shape = 's32[1]{0}', space=sflag, size = 0x4, scoped, tag = 'scoped memory for decoder_rnn_forward.4']
    %7 = vsyncpa [#allocation5], 0
    // Predicated region
    $region2: #{decoder_rnn_forward.4} parent=1 // pred_check
      _
    $region3: #{decoder_rnn_forward.4} parent=1 // pred_check_branch
      %9 = sbr.rel (0) target = $region5
    $region4: #{decoder_rnn_forward.4} parent=1 // pred_region
      _
    $region5: #{decoder_rnn_forward.4} parent=1 // pred_fallthru
      _
    // Predicated region
    $region6: #{decoder_rnn_forward.4} parent=1 // pred_check
      _
    $region7: #{decoder_rnn_forward.4} parent=1 // pred_check_branch
      %11 = sbr.rel (0) target = $region9
    $region8: #{decoder_rnn_forward.4} parent=1 // pred_region
      %13 = vsyncadd [#allocation5], 0
      %s14 = sshll.u32 %s1, 4
      %s15 = int_to_ptr.hbm [resolvable:$true] %s14
      %s16 = sshll.u32 [#allocation4], 4
      %s17 = int_to_ptr.vmem [resolvable:$true] %s16
      %22 = dma.hbm_to_vmem [thread:$0]  %s15, 8192, %s17, [#allocation5], 512, 512, 32
    $region9: #{decoder_rnn_forward.4} parent=1 // pred_fallthru
      _
    // Predicated region
    $region10: #{decoder_rnn_forward.4} parent=1 // pred_check
      _
    $region11: #{decoder_rnn_forward.4} parent=1 // pred_check_branch
      %24 = sbr.rel (0) target = $region13
    $region12: #{decoder_rnn_forward.4} parent=1 // pred_region
      %26 = dma.done [#allocation5], 8192
    $region13: #{decoder_rnn_forward.4} parent=1 // pred_fallthru
      _
    %p27 = scmp.eq.s32.totalorder 0, 0
    // Predicated region
    $region14: #{decoder_rnn_forward.4} parent=1 // pred_check
      %p28 = pneg %p27
    $region15: #{decoder_rnn_forward.4} parent=1 // pred_check_branch
      %30 = sbr.rel (%p28) target = $region17
    $region16: #{decoder_rnn_forward.4} parent=1 // pred_region
      %31 = vst [vmem:[#allocation2] sm:$0xff] 0.0
      %32 = vst [vmem:[#allocation3] sm:$0xff] 0.0
    $region17: #{decoder_rnn_forward.4} parent=1 // pred_fallthru
      _
    %v33 = vld [vmem:[#allocation4] sm:$0xff]
    %v34 = vld [vmem:[#allocation4 + $0x8] sm:$0xff]
    %v35 = vld [vmem:[#allocation4 + $0x10] sm:$0xff]
    %v36 = vld [vmem:[#allocation4 + $0x18] sm:$0xff]
    %v37 = vld [vmem:[#allocation4 + $0x20] sm:$0xff]
    %v38 = vld [vmem:[#allocation4 + $0x28] sm:$0xff]
    %v39 = vld [vmem:[#allocation4 + $0x30] sm:$0xff]
    %v40 = vld [vmem:[#allocation4 + $0x38] sm:$0xff]
    %v41 = vld [vmem:[#allocation4 + $0x40] sm:$0xff]
    %v42 = vld [vmem:[#allocation4 + $0x48] sm:$0xff]
    %v43 = vld [vmem:[#allocation4 + $0x50] sm:$0xff]
    %v44 = vld [vmem:[#allocation4 + $0x58] sm:$0xff]
    %v45 = vld [vmem:[#allocation4 + $0x60] sm:$0xff]
    %v46 = vld [vmem:[#allocation4 + $0x68] sm:$0xff]
    %v47 = vld [vmem:[#allocation4 + $0x70] sm:$0xff]
    %v48 = vld [vmem:[#allocation4 + $0x78] sm:$0xff]
    %v49 = vld [vmem:[#allocation4 + $0x80] sm:$0xff]
    %v50 = vld [vmem:[#allocation4 + $0x88] sm:$0xff]
    %v51 = vld [vmem:[#allocation4 + $0x90] sm:$0xff]
    %v52 = vld [vmem:[#allocation4 + $0x98] sm:$0xff]
    %v53 = vld [vmem:[#allocation4 + $0xa0] sm:$0xff]
    %v54 = vld [vmem:[#allocation4 + $0xa8] sm:$0xff]
    %v55 = vld [vmem:[#allocation4 + $0xb0] sm:$0xff]
    %v56 = vld [vmem:[#allocation4 + $0xb8] sm:$0xff]
    %v57 = vld [vmem:[#allocation4 + $0xc0] sm:$0xff]
    %v58 = vld [vmem:[#allocation4 + $0xc8] sm:$0xff]
    %v59 = vld [vmem:[#allocation4 + $0xd0] sm:$0xff]
    %v60 = vld [vmem:[#allocation4 + $0xd8] sm:$0xff]
    %v61 = vld [vmem:[#allocation4 + $0xe0] sm:$0xff]
    %v62 = vld [vmem:[#allocation4 + $0xe8] sm:$0xff]
    %v63 = vld [vmem:[#allocation4 + $0xf0] sm:$0xff]
    %v64 = vld [vmem:[#allocation4 + $0xf8] sm:$0xff]
    %v65 = vld [vmem:[#allocation4 + $0x100] sm:$0xff]
    %v66 = vld [vmem:[#allocation4 + $0x108] sm:$0xff]
    %v67 = vld [vmem:[#allocation4 + $0x110] sm:$0xff]
    %v68 = vld [vmem:[#allocation4 + $0x118] sm:$0xff]
    %v69 = vld [vmem:[#allocation4 + $0x120] sm:$0xff]
    %v70 = vld [vmem:[#allocation4 + $0x128] sm:$0xff]
    %v71 = vld [vmem:[#allocation4 + $0x130] sm:$0xff]
    %v72 = vld [vmem:[#allocation4 + $0x138] sm:$0xff]
    %v73 = vld [vmem:[#allocation4 + $0x140] sm:$0xff]
    %v74 = vld [vmem:[#allocation4 + $0x148] sm:$0xff]
    %v75 = vld [vmem:[#allocation4 + $0x150] sm:$0xff]
    %v76 = vld [vmem:[#allocation4 + $0x158] sm:$0xff]
    %v77 = vld [vmem:[#allocation4 + $0x160] sm:$0xff]
    %v78 = vld [vmem:[#allocation4 + $0x168] sm:$0xff]
    %v79 = vld [vmem:[#allocation4 + $0x170] sm:$0xff]
    %v80 = vld [vmem:[#allocation4 + $0x178] sm:$0xff]
    %v81 = vld [vmem:[#allocation4 + $0x180] sm:$0xff]
    %v82 = vld [vmem:[#allocation4 + $0x188] sm:$0xff]
    %v83 = vld [vmem:[#allocation4 + $0x190] sm:$0xff]
    %v84 = vld [vmem:[#allocation4 + $0x198] sm:$0xff]
    %v85 = vld [vmem:[#allocation4 + $0x1a0] sm:$0xff]
    %v86 = vld [vmem:[#allocation4 + $0x1a8] sm:$0xff]
    %v87 = vld [vmem:[#allocation4 + $0x1b0] sm:$0xff]
    %v88 = vld [vmem:[#allocation4 + $0x1b8] sm:$0xff]
    %v89 = vld [vmem:[#allocation4 + $0x1c0] sm:$0xff]
    %v90 = vld [vmem:[#allocation4 + $0x1c8] sm:$0xff]
    %v91 = vld [vmem:[#allocation4 + $0x1d0] sm:$0xff]
    %v92 = vld [vmem:[#allocation4 + $0x1d8] sm:$0xff]
    %v93 = vld [vmem:[#allocation4 + $0x1e0] sm:$0xff]
    %v94 = vld [vmem:[#allocation4 + $0x1e8] sm:$0xff]
    %v95 = vld [vmem:[#allocation4 + $0x1f0] sm:$0xff]
    %v96 = vld [vmem:[#allocation4 + $0x1f8] sm:$0xff]
    %v97 = vld [vmem:[#allocation2] sm:$0xff]
    %v98 = vld [vmem:[#allocation3] sm:$0xff]
    %v99 = vld [vmem:[%s0] sm:$0xff]
    %v100 = vld [vmem:[%s0 + $0x8] sm:$0xff]
    %v101 = vld [vmem:[%s0 + $0x10] sm:$0xff]
    %v102 = vld [vmem:[%s0 + $0x18] sm:$0xff]
    %103 = vmatpush.msra.mxu0 %v93
    %104 = vmatpush.msra.mxu0 %v89
    %105 = vmatpush.msra.mxu0 %v85
    %106 = vmatpush.msra.mxu0 %v81
    %107 = vmatpush.msra.mxu0 %v77
    %108 = vmatpush.msra.mxu0 %v73
    %109 = vmatpush.msra.mxu0 %v69
    %110 = vmatpush.msra.mxu0 %v65
    %111 = vmatpush.msra.mxu0 %v61
    %112 = vmatpush.msra.mxu0 %v57
    %113 = vmatpush.msra.mxu0 %v53
    %114 = vmatpush.msra.mxu0 %v49
    %115 = vmatpush.msra.mxu0 %v45
    %116 = vmatpush.msra.mxu0 %v41
    %117 = vmatpush.msra.mxu0 %v37
    %118 = vmatpush.msra.mxu0 %v33
    %119 = vmatmul.f32.gmra.mxu0 %v97
    %v120 = vpop.f32.mrf.mxu0
    %v121 = vadd.f32 0.0, %v120
    %122 = vdwg.mxu0
    %123 = vmatpush.msra.mxu0 %v94
    %124 = vmatpush.msra.mxu0 %v90
    %125 = vmatpush.msra.mxu0 %v86
    %126 = vmatpush.msra.mxu0 %v82
    %127 = vmatpush.msra.mxu0 %v78
    %128 = vmatpush.msra.mxu0 %v74
    %129 = vmatpush.msra.mxu0 %v70
    %130 = vmatpush.msra.mxu0 %v66
    %131 = vmatpush.msra.mxu0 %v62
    %132 = vmatpush.msra.mxu0 %v58
    %133 = vmatpush.msra.mxu0 %v54
    %134 = vmatpush.msra.mxu0 %v50
    %135 = vmatpush.msra.mxu0 %v46
    %136 = vmatpush.msra.mxu0 %v42
    %137 = vmatpush.msra.mxu0 %v38
    %138 = vmatpush.msra.mxu0 %v34
    %139 = vmatmul.f32.gmra.mxu0 %v97
    %v140 = vpop.f32.mrf.mxu0
    %v141 = vadd.f32 0.0, %v140
    %142 = vdwg.mxu0
    %143 = vmatpush.msra.mxu0 %v95
    %144 = vmatpush.msra.mxu0 %v91
    %145 = vmatpush.msra.mxu0 %v87
    %146 = vmatpush.msra.mxu0 %v83
    %147 = vmatpush.msra.mxu0 %v79
    %148 = vmatpush.msra.mxu0 %v75
    %149 = vmatpush.msra.mxu0 %v71
    %150 = vmatpush.msra.mxu0 %v67
    %151 = vmatpush.msra.mxu0 %v63
    %152 = vmatpush.msra.mxu0 %v59
    %153 = vmatpush.msra.mxu0 %v55
    %154 = vmatpush.msra.mxu0 %v51
    %155 = vmatpush.msra.mxu0 %v47
    %156 = vmatpush.msra.mxu0 %v43
    %157 = vmatpush.msra.mxu0 %v39
    %158 = vmatpush.msra.mxu0 %v35
    %159 = vmatmul.f32.gmra.mxu0 %v97
    %v160 = vpop.f32.mrf.mxu0
    %v161 = vadd.f32 0.0, %v160
    %162 = vdwg.mxu0
    %163 = vmatpush.msra.mxu0 %v96
    %164 = vmatpush.msra.mxu0 %v92
    %165 = vmatpush.msra.mxu0 %v88
    %166 = vmatpush.msra.mxu0 %v84
    %167 = vmatpush.msra.mxu0 %v80
    %168 = vmatpush.msra.mxu0 %v76
    %169 = vmatpush.msra.mxu0 %v72
    %170 = vmatpush.msra.mxu0 %v68
    %171 = vmatpush.msra.mxu0 %v64
    %172 = vmatpush.msra.mxu0 %v60
    %173 = vmatpush.msra.mxu0 %v56
    %174 = vmatpush.msra.mxu0 %v52
    %175 = vmatpush.msra.mxu0 %v48
    %176 = vmatpush.msra.mxu0 %v44
    %177 = vmatpush.msra.mxu0 %v40
    %178 = vmatpush.msra.mxu0 %v36
    %179 = vmatmul.f32.gmra.mxu0 %v97
    %v180 = vpop.f32.mrf.mxu0
    %v181 = vadd.f32 0.0, %v180
    %182 = vdwg.mxu0
    %v183 = vadd.f32 %v99, %v121
    %v184 = vadd.f32 %v100, %v141
    %v185 = vadd.f32 %v101, %v161
    %v186 = vadd.f32 %v102, %v181
    %v187 = vmul.f32 %v183, 0.5
    %v188 = vtanh.pop %v187
    %v189 = vadd.f32 %v188, 1.0
    %v190 = vmul.f32 %v189, 0.5
    %v191 = vmul.f32 %v184, 0.5
    %v192 = vtanh.pop %v191
    %v193 = vadd.f32 %v192, 1.0
    %v194 = vmul.f32 %v193, 0.5
    %v195 = vtanh.pop %v185
    %v196 = vmul.f32 %v186, 0.5
    %v197 = vtanh.pop %v196
    %v198 = vadd.f32 %v197, 1.0
    %v199 = vmul.f32 %v198, 0.5
    %v200 = vmul.f32 %v194, %v98
    %v201 = vmul.f32 %v190, %v195
    %v202 = vadd.f32 %v200, %v201
    %v203 = vtanh.pop %v202
    %v204 = vmul.f32 %v199, %v203
    %205 = vst [vmem:[#allocation2] sm:$0xff] %v204
    %206 = vst [vmem:[#allocation3] sm:$0xff] %v202
    %207 = vst [vmem:[%s2] sm:$0xff] %v204
    %v208 = vld [vmem:[#allocation2] sm:$0xff]
    %v209 = vld [vmem:[#allocation3] sm:$0xff]
    %s210 = scalar_lea.vmem %s0, 32
    %v211 = vld [vmem:[%s210] sm:$0xff]
    %v212 = vld [vmem:[%s210 + $0x8] sm:$0xff]
    %v213 = vld [vmem:[%s210 + $0x10] sm:$0xff]
    %v214 = vld [vmem:[%s210 + $0x18] sm:$0xff]
    %215 = vmatpush.msra.mxu0 %v93
    %216 = vmatpush.msra.mxu0 %v89
    %217 = vmatpush.msra.mxu0 %v85
    %218 = vmatpush.msra.mxu0 %v81
    %219 = vmatpush.msra.mxu0 %v77
    %220 = vmatpush.msra.mxu0 %v73
    %221 = vmatpush.msra.mxu0 %v69
    %222 = vmatpush.msra.mxu0 %v65
    %223 = vmatpush.msra.mxu0 %v61
    %224 = vmatpush.msra.mxu0 %v57
    %225 = vmatpush.msra.mxu0 %v53
    %226 = vmatpush.msra.mxu0 %v49
    %227 = vmatpush.msra.mxu0 %v45
    %228 = vmatpush.msra.mxu0 %v41
    %229 = vmatpush.msra.mxu0 %v37
    %230 = vmatpush.msra.mxu0 %v33
    %231 = vmatmul.f32.gmra.mxu0 %v208
    %v232 = vpop.f32.mrf.mxu0
    %v233 = vadd.f32 0.0, %v232
    %234 = vdwg.mxu0
    %235 = vmatpush.msra.mxu0 %v94
    %236 = vmatpush.msra.mxu0 %v90
    %237 = vmatpush.msra.mxu0 %v86
    %238 = vmatpush.msra.mxu0 %v82
    %239 = vmatpush.msra.mxu0 %v78
    %240 = vmatpush.msra.mxu0 %v74
    %241 = vmatpush.msra.mxu0 %v70
    %242 = vmatpush.msra.mxu0 %v66
    %243 = vmatpush.msra.mxu0 %v62
    %244 = vmatpush.msra.mxu0 %v58
    %245 = vmatpush.msra.mxu0 %v54
    %246 = vmatpush.msra.mxu0 %v50
    %247 = vmatpush.msra.mxu0 %v46
    %248 = vmatpush.msra.mxu0 %v42
    %249 = vmatpush.msra.mxu0 %v38
    %250 = vmatpush.msra.mxu0 %v34
    %251 = vmatmul.f32.gmra.mxu0 %v208
    %v252 = vpop.f32.mrf.mxu0
    %v253 = vadd.f32 0.0, %v252
    %254 = vdwg.mxu0
    %255 = vmatpush.msra.mxu0 %v95
    %256 = vmatpush.msra.mxu0 %v91
    %257 = vmatpush.msra.mxu0 %v87
    %258 = vmatpush.msra.mxu0 %v83
    %259 = vmatpush.msra.mxu0 %v79
    %260 = vmatpush.msra.mxu0 %v75
    %261 = vmatpush.msra.mxu0 %v71
    %262 = vmatpush.msra.mxu0 %v67
    %263 = vmatpush.msra.mxu0 %v63
    %264 = vmatpush.msra.mxu0 %v59
    %265 = vmatpush.msra.mxu0 %v55
    %266 = vmatpush.msra.mxu0 %v51
    %267 = vmatpush.msra.mxu0 %v47
    %268 = vmatpush.msra.mxu0 %v43
    %269 = vmatpush.msra.mxu0 %v39
    %270 = vmatpush.msra.mxu0 %v35
    %271 = vmatmul.f32.gmra.mxu0 %v208
    %v272 = vpop.f32.mrf.mxu0
    %v273 = vadd.f32 0.0, %v272
    %274 = vdwg.mxu0
    %275 = vmatpush.msra.mxu0 %v96
    %276 = vmatpush.msra.mxu0 %v92
    %277 = vmatpush.msra.mxu0 %v88
    %278 = vmatpush.msra.mxu0 %v84
    %279 = vmatpush.msra.mxu0 %v80
    %280 = vmatpush.msra.mxu0 %v76
    %281 = vmatpush.msra.mxu0 %v72
    %282 = vmatpush.msra.mxu0 %v68
    %283 = vmatpush.msra.mxu0 %v64
    %284 = vmatpush.msra.mxu0 %v60
    %285 = vmatpush.msra.mxu0 %v56
    %286 = vmatpush.msra.mxu0 %v52
    %287 = vmatpush.msra.mxu0 %v48
    %288 = vmatpush.msra.mxu0 %v44
    %289 = vmatpush.msra.mxu0 %v40
    %290 = vmatpush.msra.mxu0 %v36
    %291 = vmatmul.f32.gmra.mxu0 %v208
    %v292 = vpop.f32.mrf.mxu0
    %v293 = vadd.f32 0.0, %v292
    %294 = vdwg.mxu0
    %v295 = vadd.f32 %v211, %v233
    %v296 = vadd.f32 %v212, %v253
    %v297 = vadd.f32 %v213, %v273
    %v298 = vadd.f32 %v214, %v293
    %v299 = vmul.f32 %v295, 0.5
    %v300 = vtanh.pop %v299
    %v301 = vadd.f32 %v300, 1.0
    %v302 = vmul.f32 %v301, 0.5
    %v303 = vmul.f32 %v296, 0.5
    %v304 = vtanh.pop %v303
    %v305 = vadd.f32 %v304, 1.0
    %v306 = vmul.f32 %v305, 0.5
    %v307 = vtanh.pop %v297
    %v308 = vmul.f32 %v298, 0.5
    %v309 = vtanh.pop %v308
    %v310 = vadd.f32 %v309, 1.0
    %v311 = vmul.f32 %v310, 0.5
    %v312 = vmul.f32 %v306, %v209
    %v313 = vmul.f32 %v302, %v307
    %v314 = vadd.f32 %v312, %v313
    %v315 = vtanh.pop %v314
    %v316 = vmul.f32 %v311, %v315
    %317 = vst [vmem:[#allocation2] sm:$0xff] %v316
    %318 = vst [vmem:[#allocation3] sm:$0xff] %v314
    %s319 = scalar_lea.vmem %s2, 8
    %320 = vst [vmem:[%s319] sm:$0xff] %v316
    %v321 = vld [vmem:[#allocation2] sm:$0xff]
    %v322 = vld [vmem:[#allocation3] sm:$0xff]
    %s323 = scalar_lea.vmem %s0, 64
    %v324 = vld [vmem:[%s323] sm:$0xff]
    %v325 = vld [vmem:[%s323 + $0x8] sm:$0xff]
    %v326 = vld [vmem:[%s323 + $0x10] sm:$0xff]
    %v327 = vld [vmem:[%s323 + $0x18] sm:$0xff]
    %328 = vmatpush.msra.mxu0 %v93
    %329 = vmatpush.msra.mxu0 %v89
    %330 = vmatpush.msra.mxu0 %v85
    %331 = vmatpush.msra.mxu0 %v81
    %332 = vmatpush.msra.mxu0 %v77
    %333 = vmatpush.msra.mxu0 %v73
    %334 = vmatpush.msra.mxu0 %v69
    %335 = vmatpush.msra.mxu0 %v65
    %336 = vmatpush.msra.mxu0 %v61
    %337 = vmatpush.msra.mxu0 %v57
    %338 = vmatpush.msra.mxu0 %v53
    %339 = vmatpush.msra.mxu0 %v49
    %340 = vmatpush.msra.mxu0 %v45
    %341 = vmatpush.msra.mxu0 %v41
    %342 = vmatpush.msra.mxu0 %v37
    %343 = vmatpush.msra.mxu0 %v33
    %344 = vmatmul.f32.gmra.mxu0 %v321
    %v345 = vpop.f32.mrf.mxu0
    %v346 = vadd.f32 0.0, %v345
    %347 = vdwg.mxu0
    %348 = vmatpush.msra.mxu0 %v94
    %349 = vmatpush.msra.mxu0 %v90
    %350 = vmatpush.msra.mxu0 %v86
    %351 = vmatpush.msra.mxu0 %v82
    %352 = vmatpush.msra.mxu0 %v78
    %353 = vmatpush.msra.mxu0 %v74
    %354 = vmatpush.msra.mxu0 %v70
    %355 = vmatpush.msra.mxu0 %v66
    %356 = vmatpush.msra.mxu0 %v62
    %357 = vmatpush.msra.mxu0 %v58
    %358 = vmatpush.msra.mxu0 %v54
    %359 = vmatpush.msra.mxu0 %v50
    %360 = vmatpush.msra.mxu0 %v46
    %361 = vmatpush.msra.mxu0 %v42
    %362 = vmatpush.msra.mxu0 %v38
    %363 = vmatpush.msra.mxu0 %v34
    %364 = vmatmul.f32.gmra.mxu0 %v321
    %v365 = vpop.f32.mrf.mxu0
    %v366 = vadd.f32 0.0, %v365
    %367 = vdwg.mxu0
    %368 = vmatpush.msra.mxu0 %v95
    %369 = vmatpush.msra.mxu0 %v91
    %370 = vmatpush.msra.mxu0 %v87
    %371 = vmatpush.msra.mxu0 %v83
    %372 = vmatpush.msra.mxu0 %v79
    %373 = vmatpush.msra.mxu0 %v75
    %374 = vmatpush.msra.mxu0 %v71
    %375 = vmatpush.msra.mxu0 %v67
    %376 = vmatpush.msra.mxu0 %v63
    %377 = vmatpush.msra.mxu0 %v59
    %378 = vmatpush.msra.mxu0 %v55
    %379 = vmatpush.msra.mxu0 %v51
    %380 = vmatpush.msra.mxu0 %v47
    %381 = vmatpush.msra.mxu0 %v43
    %382 = vmatpush.msra.mxu0 %v39
    %383 = vmatpush.msra.mxu0 %v35
    %384 = vmatmul.f32.gmra.mxu0 %v321
    %v385 = vpop.f32.mrf.mxu0
    %v386 = vadd.f32 0.0, %v385
    %387 = vdwg.mxu0
    %388 = vmatpush.msra.mxu0 %v96
    %389 = vmatpush.msra.mxu0 %v92
    %390 = vmatpush.msra.mxu0 %v88
    %391 = vmatpush.msra.mxu0 %v84
    %392 = vmatpush.msra.mxu0 %v80
    %393 = vmatpush.msra.mxu0 %v76
    %394 = vmatpush.msra.mxu0 %v72
    %395 = vmatpush.msra.mxu0 %v68
    %396 = vmatpush.msra.mxu0 %v64
    %397 = vmatpush.msra.mxu0 %v60
    %398 = vmatpush.msra.mxu0 %v56
    %399 = vmatpush.msra.mxu0 %v52
    %400 = vmatpush.msra.mxu0 %v48
    %401 = vmatpush.msra.mxu0 %v44
    %402 = vmatpush.msra.mxu0 %v40
    %403 = vmatpush.msra.mxu0 %v36
    %404 = vmatmul.f32.gmra.mxu0 %v321
    %v405 = vpop.f32.mrf.mxu0
    %v406 = vadd.f32 0.0, %v405
    %407 = vdwg.mxu0
    %v408 = vadd.f32 %v324, %v346
    %v409 = vadd.f32 %v325, %v366
    %v410 = vadd.f32 %v326, %v386
    %v411 = vadd.f32 %v327, %v406
    %v412 = vmul.f32 %v408, 0.5
    %v413 = vtanh.pop %v412
    %v414 = vadd.f32 %v413, 1.0
    %v415 = vmul.f32 %v414, 0.5
    %v416 = vmul.f32 %v409, 0.5
    %v417 = vtanh.pop %v416
    %v418 = vadd.f32 %v417, 1.0
    %v419 = vmul.f32 %v418, 0.5
    %v420 = vtanh.pop %v410
    %v421 = vmul.f32 %v411, 0.5
    %v422 = vtanh.pop %v421
    %v423 = vadd.f32 %v422, 1.0
    %v424 = vmul.f32 %v423, 0.5
    %v425 = vmul.f32 %v419, %v322
    %v426 = vmul.f32 %v415, %v420
    %v427 = vadd.f32 %v425, %v426
    %v428 = vtanh.pop %v427
    %v429 = vmul.f32 %v424, %v428
    %430 = vst [vmem:[#allocation2] sm:$0xff] %v429
    %431 = vst [vmem:[#allocation3] sm:$0xff] %v427
    %s432 = scalar_lea.vmem %s2, 16
    %433 = vst [vmem:[%s432] sm:$0xff] %v429
    %v434 = vld [vmem:[#allocation2] sm:$0xff]
    %v435 = vld [vmem:[#allocation3] sm:$0xff]
    %s436 = scalar_lea.vmem %s0, 96
    %v437 = vld [vmem:[%s436] sm:$0xff]
    %v438 = vld [vmem:[%s436 + $0x8] sm:$0xff]
    %v439 = vld [vmem:[%s436 + $0x10] sm:$0xff]
    %v440 = vld [vmem:[%s436 + $0x18] sm:$0xff]
    %441 = vmatpush.msra.mxu0 %v93
    %442 = vmatpush.msra.mxu0 %v89
    %443 = vmatpush.msra.mxu0 %v85
    %444 = vmatpush.msra.mxu0 %v81
    %445 = vmatpush.msra.mxu0 %v77
    %446 = vmatpush.msra.mxu0 %v73
    %447 = vmatpush.msra.mxu0 %v69
    %448 = vmatpush.msra.mxu0 %v65
    %449 = vmatpush.msra.mxu0 %v61
    %450 = vmatpush.msra.mxu0 %v57
    %451 = vmatpush.msra.mxu0 %v53
    %452 = vmatpush.msra.mxu0 %v49
    %453 = vmatpush.msra.mxu0 %v45
    %454 = vmatpush.msra.mxu0 %v41
    %455 = vmatpush.msra.mxu0 %v37
    %456 = vmatpush.msra.mxu0 %v33
    %457 = vmatmul.f32.gmra.mxu0 %v434
    %v458 = vpop.f32.mrf.mxu0
    %v459 = vadd.f32 0.0, %v458
    %460 = vdwg.mxu0
    %461 = vmatpush.msra.mxu0 %v94
    %462 = vmatpush.msra.mxu0 %v90
    %463 = vmatpush.msra.mxu0 %v86
    %464 = vmatpush.msra.mxu0 %v82
    %465 = vmatpush.msra.mxu0 %v78
    %466 = vmatpush.msra.mxu0 %v74
    %467 = vmatpush.msra.mxu0 %v70
    %468 = vmatpush.msra.mxu0 %v66
    %469 = vmatpush.msra.mxu0 %v62
    %470 = vmatpush.msra.mxu0 %v58
    %471 = vmatpush.msra.mxu0 %v54
    %472 = vmatpush.msra.mxu0 %v50
    %473 = vmatpush.msra.mxu0 %v46
    %474 = vmatpush.msra.mxu0 %v42
    %475 = vmatpush.msra.mxu0 %v38
    %476 = vmatpush.msra.mxu0 %v34
    %477 = vmatmul.f32.gmra.mxu0 %v434
    %v478 = vpop.f32.mrf.mxu0
    %v479 = vadd.f32 0.0, %v478
    %480 = vdwg.mxu0
    %481 = vmatpush.msra.mxu0 %v95
    %482 = vmatpush.msra.mxu0 %v91
    %483 = vmatpush.msra.mxu0 %v87
    %484 = vmatpush.msra.mxu0 %v83
    %485 = vmatpush.msra.mxu0 %v79
    %486 = vmatpush.msra.mxu0 %v75
    %487 = vmatpush.msra.mxu0 %v71
    %488 = vmatpush.msra.mxu0 %v67
    %489 = vmatpush.msra.mxu0 %v63
    %490 = vmatpush.msra.mxu0 %v59
    %491 = vmatpush.msra.mxu0 %v55
    %492 = vmatpush.msra.mxu0 %v51
    %493 = vmatpush.msra.mxu0 %v47
    %494 = vmatpush.msra.mxu0 %v43
    %495 = vmatpush.msra.mxu0 %v39
    %496 = vmatpush.msra.mxu0 %v35
    %497 = vmatmul.f32.gmra.mxu0 %v434
    %v498 = vpop.f32.mrf.mxu0
    %v499 = vadd.f32 0.0, %v498
    %500 = vdwg.mxu0
    %501 = vmatpush.msra.mxu0 %v96
    %502 = vmatpush.msra.mxu0 %v92
    %503 = vmatpush.msra.mxu0 %v88
    %504 = vmatpush.msra.mxu0 %v84
    %505 = vmatpush.msra.mxu0 %v80
    %506 = vmatpush.msra.mxu0 %v76
    %507 = vmatpush.msra.mxu0 %v72
    %508 = vmatpush.msra.mxu0 %v68
    %509 = vmatpush.msra.mxu0 %v64
    %510 = vmatpush.msra.mxu0 %v60
    %511 = vmatpush.msra.mxu0 %v56
    %512 = vmatpush.msra.mxu0 %v52
    %513 = vmatpush.msra.mxu0 %v48
    %514 = vmatpush.msra.mxu0 %v44
    %515 = vmatpush.msra.mxu0 %v40
    %516 = vmatpush.msra.mxu0 %v36
    %517 = vmatmul.f32.gmra.mxu0 %v434
    %v518 = vpop.f32.mrf.mxu0
    %v519 = vadd.f32 0.0, %v518
    %520 = vdwg.mxu0
    %v521 = vadd.f32 %v437, %v459
    %v522 = vadd.f32 %v438, %v479
    %v523 = vadd.f32 %v439, %v499
    %v524 = vadd.f32 %v440, %v519
    %v525 = vmul.f32 %v521, 0.5
    %v526 = vtanh.pop %v525
    %v527 = vadd.f32 %v526, 1.0
    %v528 = vmul.f32 %v527, 0.5
    %v529 = vmul.f32 %v522, 0.5
    %v530 = vtanh.pop %v529
    %v531 = vadd.f32 %v530, 1.0
    %v532 = vmul.f32 %v531, 0.5
    %v533 = vtanh.pop %v523
    %v534 = vmul.f32 %v524, 0.5
    %v535 = vtanh.pop %v534
    %v536 = vadd.f32 %v535, 1.0
    %v537 = vmul.f32 %v536, 0.5
    %v538 = vmul.f32 %v532, %v435
    %v539 = vmul.f32 %v528, %v533
    %v540 = vadd.f32 %v538, %v539
    %v541 = vtanh.pop %v540
    %v542 = vmul.f32 %v537, %v541
    %543 = vst [vmem:[#allocation2] sm:$0xff] %v542
    %544 = vst [vmem:[#allocation3] sm:$0xff] %v540
    %s545 = scalar_lea.vmem %s2, 24
    %546 = vst [vmem:[%s545] sm:$0xff] %v542
    %v547 = vld [vmem:[#allocation2] sm:$0xff]
    %v548 = vld [vmem:[#allocation3] sm:$0xff]
    %s549 = scalar_lea.vmem %s0, 128
    %v550 = vld [vmem:[%s549] sm:$0xff]
    %v551 = vld [vmem:[%s549 + $0x8] sm:$0xff]
    %v552 = vld [vmem:[%s549 + $0x10] sm:$0xff]
    %v553 = vld [vmem:[%s549 + $0x18] sm:$0xff]
    %554 = vmatpush.msra.mxu0 %v93
    %555 = vmatpush.msra.mxu0 %v89
    %556 = vmatpush.msra.mxu0 %v85
    %557 = vmatpush.msra.mxu0 %v81
    %558 = vmatpush.msra.mxu0 %v77
    %559 = vmatpush.msra.mxu0 %v73
    %560 = vmatpush.msra.mxu0 %v69
    %561 = vmatpush.msra.mxu0 %v65
    %562 = vmatpush.msra.mxu0 %v61
    %563 = vmatpush.msra.mxu0 %v57
    %564 = vmatpush.msra.mxu0 %v53
    %565 = vmatpush.msra.mxu0 %v49
    %566 = vmatpush.msra.mxu0 %v45
    %567 = vmatpush.msra.mxu0 %v41
    %568 = vmatpush.msra.mxu0 %v37
    %569 = vmatpush.msra.mxu0 %v33
    %570 = vmatmul.f32.gmra.mxu0 %v547
    %v571 = vpop.f32.mrf.mxu0
    %v572 = vadd.f32 0.0, %v571
    %573 = vdwg.mxu0
    %574 = vmatpush.msra.mxu0 %v94
    %575 = vmatpush.msra.mxu0 %v90
    %576 = vmatpush.msra.mxu0 %v86
    %577 = vmatpush.msra.mxu0 %v82
    %578 = vmatpush.msra.mxu0 %v78
    %579 = vmatpush.msra.mxu0 %v74
    %580 = vmatpush.msra.mxu0 %v70
    %581 = vmatpush.msra.mxu0 %v66
    %582 = vmatpush.msra.mxu0 %v62
    %583 = vmatpush.msra.mxu0 %v58
    %584 = vmatpush.msra.mxu0 %v54
    %585 = vmatpush.msra.mxu0 %v50
    %586 = vmatpush.msra.mxu0 %v46
    %587 = vmatpush.msra.mxu0 %v42
    %588 = vmatpush.msra.mxu0 %v38
    %589 = vmatpush.msra.mxu0 %v34
    %590 = vmatmul.f32.gmra.mxu0 %v547
    %v591 = vpop.f32.mrf.mxu0
    %v592 = vadd.f32 0.0, %v591
    %593 = vdwg.mxu0
    %594 = vmatpush.msra.mxu0 %v95
    %595 = vmatpush.msra.mxu0 %v91
    %596 = vmatpush.msra.mxu0 %v87
    %597 = vmatpush.msra.mxu0 %v83
    %598 = vmatpush.msra.mxu0 %v79
    %599 = vmatpush.msra.mxu0 %v75
    %600 = vmatpush.msra.mxu0 %v71
    %601 = vmatpush.msra.mxu0 %v67
    %602 = vmatpush.msra.mxu0 %v63
    %603 = vmatpush.msra.mxu0 %v59
    %604 = vmatpush.msra.mxu0 %v55
    %605 = vmatpush.msra.mxu0 %v51
    %606 = vmatpush.msra.mxu0 %v47
    %607 = vmatpush.msra.mxu0 %v43
    %608 = vmatpush.msra.mxu0 %v39
    %609 = vmatpush.msra.mxu0 %v35
    %610 = vmatmul.f32.gmra.mxu0 %v547
    %v611 = vpop.f32.mrf.mxu0
    %v612 = vadd.f32 0.0, %v611
    %613 = vdwg.mxu0
    %614 = vmatpush.msra.mxu0 %v96
    %615 = vmatpush.msra.mxu0 %v92
    %616 = vmatpush.msra.mxu0 %v88
    %617 = vmatpush.msra.mxu0 %v84
    %618 = vmatpush.msra.mxu0 %v80
    %619 = vmatpush.msra.mxu0 %v76
    %620 = vmatpush.msra.mxu0 %v72
    %621 = vmatpush.msra.mxu0 %v68
    %622 = vmatpush.msra.mxu0 %v64
    %623 = vmatpush.msra.mxu0 %v60
    %624 = vmatpush.msra.mxu0 %v56
    %625 = vmatpush.msra.mxu0 %v52
    %626 = vmatpush.msra.mxu0 %v48
    %627 = vmatpush.msra.mxu0 %v44
    %628 = vmatpush.msra.mxu0 %v40
    %629 = vmatpush.msra.mxu0 %v36
    %630 = vmatmul.f32.gmra.mxu0 %v547
    %v631 = vpop.f32.mrf.mxu0
    %v632 = vadd.f32 0.0, %v631
    %633 = vdwg.mxu0
    %v634 = vadd.f32 %v550, %v572
    %v635 = vadd.f32 %v551, %v592
    %v636 = vadd.f32 %v552, %v612
    %v637 = vadd.f32 %v553, %v632
    %v638 = vmul.f32 %v634, 0.5
    %v639 = vtanh.pop %v638
    %v640 = vadd.f32 %v639, 1.0
    %v641 = vmul.f32 %v640, 0.5
    %v642 = vmul.f32 %v635, 0.5
    %v643 = vtanh.pop %v642
    %v644 = vadd.f32 %v643, 1.0
    %v645 = vmul.f32 %v644, 0.5
    %v646 = vtanh.pop %v636
    %v647 = vmul.f32 %v637, 0.5
    %v648 = vtanh.pop %v647
    %v649 = vadd.f32 %v648, 1.0
    %v650 = vmul.f32 %v649, 0.5
    %v651 = vmul.f32 %v645, %v548
    %v652 = vmul.f32 %v641, %v646
    %v653 = vadd.f32 %v651, %v652
    %v654 = vtanh.pop %v653
    %v655 = vmul.f32 %v650, %v654
    %656 = vst [vmem:[#allocation2] sm:$0xff] %v655
    %657 = vst [vmem:[#allocation3] sm:$0xff] %v653
    %s658 = scalar_lea.vmem %s2, 32
    %659 = vst [vmem:[%s658] sm:$0xff] %v655
    %v660 = vld [vmem:[#allocation2] sm:$0xff]
    %v661 = vld [vmem:[#allocation3] sm:$0xff]
    %s662 = scalar_lea.vmem %s0, 160
    %v663 = vld [vmem:[%s662] sm:$0xff]
    %v664 = vld [vmem:[%s662 + $0x8] sm:$0xff]
    %v665 = vld [vmem:[%s662 + $0x10] sm:$0xff]
    %v666 = vld [vmem:[%s662 + $0x18] sm:$0xff]
    %667 = vmatpush.msra.mxu0 %v93
    %668 = vmatpush.msra.mxu0 %v89
    %669 = vmatpush.msra.mxu0 %v85
    %670 = vmatpush.msra.mxu0 %v81
    %671 = vmatpush.msra.mxu0 %v77
    %672 = vmatpush.msra.mxu0 %v73
    %673 = vmatpush.msra.mxu0 %v69
    %674 = vmatpush.msra.mxu0 %v65
    %675 = vmatpush.msra.mxu0 %v61
    %676 = vmatpush.msra.mxu0 %v57
    %677 = vmatpush.msra.mxu0 %v53
    %678 = vmatpush.msra.mxu0 %v49
    %679 = vmatpush.msra.mxu0 %v45
    %680 = vmatpush.msra.mxu0 %v41
    %681 = vmatpush.msra.mxu0 %v37
    %682 = vmatpush.msra.mxu0 %v33
    %683 = vmatmul.f32.gmra.mxu0 %v660
    %v684 = vpop.f32.mrf.mxu0
    %v685 = vadd.f32 0.0, %v684
    %686 = vdwg.mxu0
    %687 = vmatpush.msra.mxu0 %v94
    %688 = vmatpush.msra.mxu0 %v90
    %689 = vmatpush.msra.mxu0 %v86
    %690 = vmatpush.msra.mxu0 %v82
    %691 = vmatpush.msra.mxu0 %v78
    %692 = vmatpush.msra.mxu0 %v74
    %693 = vmatpush.msra.mxu0 %v70
    %694 = vmatpush.msra.mxu0 %v66
    %695 = vmatpush.msra.mxu0 %v62
    %696 = vmatpush.msra.mxu0 %v58
    %697 = vmatpush.msra.mxu0 %v54
    %698 = vmatpush.msra.mxu0 %v50
    %699 = vmatpush.msra.mxu0 %v46
    %700 = vmatpush.msra.mxu0 %v42
    %701 = vmatpush.msra.mxu0 %v38
    %702 = vmatpush.msra.mxu0 %v34
    %703 = vmatmul.f32.gmra.mxu0 %v660
    %v704 = vpop.f32.mrf.mxu0
    %v705 = vadd.f32 0.0, %v704
    %706 = vdwg.mxu0
    %707 = vmatpush.msra.mxu0 %v95
    %708 = vmatpush.msra.mxu0 %v91
    %709 = vmatpush.msra.mxu0 %v87
    %710 = vmatpush.msra.mxu0 %v83
    %711 = vmatpush.msra.mxu0 %v79
    %712 = vmatpush.msra.mxu0 %v75
    %713 = vmatpush.msra.mxu0 %v71
    %714 = vmatpush.msra.mxu0 %v67
    %715 = vmatpush.msra.mxu0 %v63
    %716 = vmatpush.msra.mxu0 %v59
    %717 = vmatpush.msra.mxu0 %v55
    %718 = vmatpush.msra.mxu0 %v51
    %719 = vmatpush.msra.mxu0 %v47
    %720 = vmatpush.msra.mxu0 %v43
    %721 = vmatpush.msra.mxu0 %v39
    %722 = vmatpush.msra.mxu0 %v35
    %723 = vmatmul.f32.gmra.mxu0 %v660
    %v724 = vpop.f32.mrf.mxu0
    %v725 = vadd.f32 0.0, %v724
    %726 = vdwg.mxu0
    %727 = vmatpush.msra.mxu0 %v96
    %728 = vmatpush.msra.mxu0 %v92
    %729 = vmatpush.msra.mxu0 %v88
    %730 = vmatpush.msra.mxu0 %v84
    %731 = vmatpush.msra.mxu0 %v80
    %732 = vmatpush.msra.mxu0 %v76
    %733 = vmatpush.msra.mxu0 %v72
    %734 = vmatpush.msra.mxu0 %v68
    %735 = vmatpush.msra.mxu0 %v64
    %736 = vmatpush.msra.mxu0 %v60
    %737 = vmatpush.msra.mxu0 %v56
    %738 = vmatpush.msra.mxu0 %v52
    %739 = vmatpush.msra.mxu0 %v48
    %740 = vmatpush.msra.mxu0 %v44
    %741 = vmatpush.msra.mxu0 %v40
    %742 = vmatpush.msra.mxu0 %v36
    %743 = vmatmul.f32.gmra.mxu0 %v660
    %v744 = vpop.f32.mrf.mxu0
    %v745 = vadd.f32 0.0, %v744
    %746 = vdwg.mxu0
    %v747 = vadd.f32 %v663, %v685
    %v748 = vadd.f32 %v664, %v705
    %v749 = vadd.f32 %v665, %v725
    %v750 = vadd.f32 %v666, %v745
    %v751 = vmul.f32 %v747, 0.5
    %v752 = vtanh.pop %v751
    %v753 = vadd.f32 %v752, 1.0
    %v754 = vmul.f32 %v753, 0.5
    %v755 = vmul.f32 %v748, 0.5
    %v756 = vtanh.pop %v755
    %v757 = vadd.f32 %v756, 1.0
    %v758 = vmul.f32 %v757, 0.5
    %v759 = vtanh.pop %v749
    %v760 = vmul.f32 %v750, 0.5
    %v761 = vtanh.pop %v760
    %v762 = vadd.f32 %v761, 1.0
    %v763 = vmul.f32 %v762, 0.5
    %v764 = vmul.f32 %v758, %v661
    %v765 = vmul.f32 %v754, %v759
    %v766 = vadd.f32 %v764, %v765
    %v767 = vtanh.pop %v766
    %v768 = vmul.f32 %v763, %v767
    %769 = vst [vmem:[#allocation2] sm:$0xff] %v768
    %770 = vst [vmem:[#allocation3] sm:$0xff] %v766
    %s771 = scalar_lea.vmem %s2, 40
    %772 = vst [vmem:[%s771] sm:$0xff] %v768
    %v773 = vld [vmem:[#allocation2] sm:$0xff]
    %v774 = vld [vmem:[#allocation3] sm:$0xff]
    %s775 = scalar_lea.vmem %s0, 192
    %v776 = vld [vmem:[%s775] sm:$0xff]
    %v777 = vld [vmem:[%s775 + $0x8] sm:$0xff]
    %v778 = vld [vmem:[%s775 + $0x10] sm:$0xff]
    %v779 = vld [vmem:[%s775 + $0x18] sm:$0xff]
    %780 = vmatpush.msra.mxu0 %v93
    %781 = vmatpush.msra.mxu0 %v89
    %782 = vmatpush.msra.mxu0 %v85
    %783 = vmatpush.msra.mxu0 %v81
    %784 = vmatpush.msra.mxu0 %v77
    %785 = vmatpush.msra.mxu0 %v73
    %786 = vmatpush.msra.mxu0 %v69
    %787 = vmatpush.msra.mxu0 %v65
    %788 = vmatpush.msra.mxu0 %v61
    %789 = vmatpush.msra.mxu0 %v57
    %790 = vmatpush.msra.mxu0 %v53
    %791 = vmatpush.msra.mxu0 %v49
    %792 = vmatpush.msra.mxu0 %v45
    %793 = vmatpush.msra.mxu0 %v41
    %794 = vmatpush.msra.mxu0 %v37
    %795 = vmatpush.msra.mxu0 %v33
    %796 = vmatmul.f32.gmra.mxu0 %v773
    %v797 = vpop.f32.mrf.mxu0
    %v798 = vadd.f32 0.0, %v797
    %799 = vdwg.mxu0
    %800 = vmatpush.msra.mxu0 %v94
    %801 = vmatpush.msra.mxu0 %v90
    %802 = vmatpush.msra.mxu0 %v86
    %803 = vmatpush.msra.mxu0 %v82
    %804 = vmatpush.msra.mxu0 %v78
    %805 = vmatpush.msra.mxu0 %v74
    %806 = vmatpush.msra.mxu0 %v70
    %807 = vmatpush.msra.mxu0 %v66
    %808 = vmatpush.msra.mxu0 %v62
    %809 = vmatpush.msra.mxu0 %v58
    %810 = vmatpush.msra.mxu0 %v54
    %811 = vmatpush.msra.mxu0 %v50
    %812 = vmatpush.msra.mxu0 %v46
    %813 = vmatpush.msra.mxu0 %v42
    %814 = vmatpush.msra.mxu0 %v38
    %815 = vmatpush.msra.mxu0 %v34
    %816 = vmatmul.f32.gmra.mxu0 %v773
    %v817 = vpop.f32.mrf.mxu0
    %v818 = vadd.f32 0.0, %v817
    %819 = vdwg.mxu0
    %820 = vmatpush.msra.mxu0 %v95
    %821 = vmatpush.msra.mxu0 %v91
    %822 = vmatpush.msra.mxu0 %v87
    %823 = vmatpush.msra.mxu0 %v83
    %824 = vmatpush.msra.mxu0 %v79
    %825 = vmatpush.msra.mxu0 %v75
    %826 = vmatpush.msra.mxu0 %v71
    %827 = vmatpush.msra.mxu0 %v67
    %828 = vmatpush.msra.mxu0 %v63
    %829 = vmatpush.msra.mxu0 %v59
    %830 = vmatpush.msra.mxu0 %v55
    %831 = vmatpush.msra.mxu0 %v51
    %832 = vmatpush.msra.mxu0 %v47
    %833 = vmatpush.msra.mxu0 %v43
    %834 = vmatpush.msra.mxu0 %v39
    %835 = vmatpush.msra.mxu0 %v35
    %836 = vmatmul.f32.gmra.mxu0 %v773
    %v837 = vpop.f32.mrf.mxu0
    %v838 = vadd.f32 0.0, %v837
    %839 = vdwg.mxu0
    %840 = vmatpush.msra.mxu0 %v96
    %841 = vmatpush.msra.mxu0 %v92
    %842 = vmatpush.msra.mxu0 %v88
    %843 = vmatpush.msra.mxu0 %v84
    %844 = vmatpush.msra.mxu0 %v80
    %845 = vmatpush.msra.mxu0 %v76
    %846 = vmatpush.msra.mxu0 %v72
    %847 = vmatpush.msra.mxu0 %v68
    %848 = vmatpush.msra.mxu0 %v64
    %849 = vmatpush.msra.mxu0 %v60
    %850 = vmatpush.msra.mxu0 %v56
    %851 = vmatpush.msra.mxu0 %v52
    %852 = vmatpush.msra.mxu0 %v48
    %853 = vmatpush.msra.mxu0 %v44
    %854 = vmatpush.msra.mxu0 %v40
    %855 = vmatpush.msra.mxu0 %v36
    %856 = vmatmul.f32.gmra.mxu0 %v773
    %v857 = vpop.f32.mrf.mxu0
    %v858 = vadd.f32 0.0, %v857
    %859 = vdwg.mxu0
    %v860 = vadd.f32 %v776, %v798
    %v861 = vadd.f32 %v777, %v818
    %v862 = vadd.f32 %v778, %v838
    %v863 = vadd.f32 %v779, %v858
    %v864 = vmul.f32 %v860, 0.5
    %v865 = vtanh.pop %v864
    %v866 = vadd.f32 %v865, 1.0
    %v867 = vmul.f32 %v866, 0.5
    %v868 = vmul.f32 %v861, 0.5
    %v869 = vtanh.pop %v868
    %v870 = vadd.f32 %v869, 1.0
    %v871 = vmul.f32 %v870, 0.5
    %v872 = vtanh.pop %v862
    %v873 = vmul.f32 %v863, 0.5
    %v874 = vtanh.pop %v873
    %v875 = vadd.f32 %v874, 1.0
    %v876 = vmul.f32 %v875, 0.5
    %v877 = vmul.f32 %v871, %v774
    %v878 = vmul.f32 %v867, %v872
    %v879 = vadd.f32 %v877, %v878
    %v880 = vtanh.pop %v879
    %v881 = vmul.f32 %v876, %v880
    %882 = vst [vmem:[#allocation2] sm:$0xff] %v881
    %883 = vst [vmem:[#allocation3] sm:$0xff] %v879
    %s884 = scalar_lea.vmem %s2, 48
    %885 = vst [vmem:[%s884] sm:$0xff] %v881
    %v886 = vld [vmem:[#allocation2] sm:$0xff]
    %v887 = vld [vmem:[#allocation3] sm:$0xff]
    %s888 = scalar_lea.vmem %s0, 224
    %v889 = vld [vmem:[%s888] sm:$0xff]
    %v890 = vld [vmem:[%s888 + $0x8] sm:$0xff]
    %v891 = vld [vmem:[%s888 + $0x10] sm:$0xff]
    %v892 = vld [vmem:[%s888 + $0x18] sm:$0xff]
    %893 = vmatpush.msra.mxu0 %v93
    %894 = vmatpush.msra.mxu0 %v89
    %895 = vmatpush.msra.mxu0 %v85
    %896 = vmatpush.msra.mxu0 %v81
    %897 = vmatpush.msra.mxu0 %v77
    %898 = vmatpush.msra.mxu0 %v73
    %899 = vmatpush.msra.mxu0 %v69
    %900 = vmatpush.msra.mxu0 %v65
    %901 = vmatpush.msra.mxu0 %v61
    %902 = vmatpush.msra.mxu0 %v57
    %903 = vmatpush.msra.mxu0 %v53
    %904 = vmatpush.msra.mxu0 %v49
    %905 = vmatpush.msra.mxu0 %v45
    %906 = vmatpush.msra.mxu0 %v41
    %907 = vmatpush.msra.mxu0 %v37
    %908 = vmatpush.msra.mxu0 %v33
    %909 = vmatmul.f32.gmra.mxu0 %v886
    %v910 = vpop.f32.mrf.mxu0
    %v911 = vadd.f32 0.0, %v910
    %912 = vdwg.mxu0
    %913 = vmatpush.msra.mxu0 %v94
    %914 = vmatpush.msra.mxu0 %v90
    %915 = vmatpush.msra.mxu0 %v86
    %916 = vmatpush.msra.mxu0 %v82
    %917 = vmatpush.msra.mxu0 %v78
    %918 = vmatpush.msra.mxu0 %v74
    %919 = vmatpush.msra.mxu0 %v70
    %920 = vmatpush.msra.mxu0 %v66
    %921 = vmatpush.msra.mxu0 %v62
    %922 = vmatpush.msra.mxu0 %v58
    %923 = vmatpush.msra.mxu0 %v54
    %924 = vmatpush.msra.mxu0 %v50
    %925 = vmatpush.msra.mxu0 %v46
    %926 = vmatpush.msra.mxu0 %v42
    %927 = vmatpush.msra.mxu0 %v38
    %928 = vmatpush.msra.mxu0 %v34
    %929 = vmatmul.f32.gmra.mxu0 %v886
    %v930 = vpop.f32.mrf.mxu0
    %v931 = vadd.f32 0.0, %v930
    %932 = vdwg.mxu0
    %933 = vmatpush.msra.mxu0 %v95
    %934 = vmatpush.msra.mxu0 %v91
    %935 = vmatpush.msra.mxu0 %v87
    %936 = vmatpush.msra.mxu0 %v83
    %937 = vmatpush.msra.mxu0 %v79
    %938 = vmatpush.msra.mxu0 %v75
    %939 = vmatpush.msra.mxu0 %v71
    %940 = vmatpush.msra.mxu0 %v67
    %941 = vmatpush.msra.mxu0 %v63
    %942 = vmatpush.msra.mxu0 %v59
    %943 = vmatpush.msra.mxu0 %v55
    %944 = vmatpush.msra.mxu0 %v51
    %945 = vmatpush.msra.mxu0 %v47
    %946 = vmatpush.msra.mxu0 %v43
    %947 = vmatpush.msra.mxu0 %v39
    %948 = vmatpush.msra.mxu0 %v35
    %949 = vmatmul.f32.gmra.mxu0 %v886
    %v950 = vpop.f32.mrf.mxu0
    %v951 = vadd.f32 0.0, %v950
    %952 = vdwg.mxu0
    %953 = vmatpush.msra.mxu0 %v96
    %954 = vmatpush.msra.mxu0 %v92
    %955 = vmatpush.msra.mxu0 %v88
    %956 = vmatpush.msra.mxu0 %v84
    %957 = vmatpush.msra.mxu0 %v80
    %958 = vmatpush.msra.mxu0 %v76
    %959 = vmatpush.msra.mxu0 %v72
    %960 = vmatpush.msra.mxu0 %v68
    %961 = vmatpush.msra.mxu0 %v64
    %962 = vmatpush.msra.mxu0 %v60
    %963 = vmatpush.msra.mxu0 %v56
    %964 = vmatpush.msra.mxu0 %v52
    %965 = vmatpush.msra.mxu0 %v48
    %966 = vmatpush.msra.mxu0 %v44
    %967 = vmatpush.msra.mxu0 %v40
    %968 = vmatpush.msra.mxu0 %v36
    %969 = vmatmul.f32.gmra.mxu0 %v886
    %v970 = vpop.f32.mrf.mxu0
    %v971 = vadd.f32 0.0, %v970
    %972 = vdwg.mxu0
    %v973 = vadd.f32 %v889, %v911
    %v974 = vadd.f32 %v890, %v931
    %v975 = vadd.f32 %v891, %v951
    %v976 = vadd.f32 %v892, %v971
    %v977 = vmul.f32 %v973, 0.5
    %v978 = vtanh.pop %v977
    %v979 = vadd.f32 %v978, 1.0
    %v980 = vmul.f32 %v979, 0.5
    %v981 = vmul.f32 %v974, 0.5
    %v982 = vtanh.pop %v981
    %v983 = vadd.f32 %v982, 1.0
    %v984 = vmul.f32 %v983, 0.5
    %v985 = vtanh.pop %v975
    %v986 = vmul.f32 %v976, 0.5
    %v987 = vtanh.pop %v986
    %v988 = vadd.f32 %v987, 1.0
    %v989 = vmul.f32 %v988, 0.5
    %v990 = vmul.f32 %v984, %v887
    %v991 = vmul.f32 %v980, %v985
    %v992 = vadd.f32 %v990, %v991
    %v993 = vtanh.pop %v992
    %v994 = vmul.f32 %v989, %v993
    %995 = vst [vmem:[#allocation2] sm:$0xff] %v994
    %996 = vst [vmem:[#allocation3] sm:$0xff] %v992
    %s997 = scalar_lea.vmem %s2, 56
    %998 = vst [vmem:[%s997] sm:$0xff] %v994
    // Predicated region
    $region18: #{decoder_rnn_forward.4} parent=1 // pred_check
      _
    $region19: #{decoder_rnn_forward.4} parent=1 // pred_check_branch
      %1000 = sbr.rel (0) target = $region21
    $region20: #{decoder_rnn_forward.4} parent=1 // pred_region
      _
    $region21: #{decoder_rnn_forward.4} parent=1 // pred_fallthru
      _
    // Predicated region
    $region22: #{decoder_rnn_forward.4} parent=1 // pred_check
      _
    $region23: #{decoder_rnn_forward.4} parent=1 // pred_check_branch
      %1002 = sbr.rel (0) target = $region25
    $region24: #{decoder_rnn_forward.4} parent=1 // pred_region
      _
    $region25: #{decoder_rnn_forward.4} parent=1 // pred_fallthru
      _
    %1003 = vsyncpa [#allocation5], 1

</llo_original>
